<compile_context>
chip_gen: v6e
topology: v6e:2x2x1
jax: 0.10.0
libtpu: 0.0.40
codegen_flags: <defaults>
</compile_context>

<pallas_src>
import functools

import jax
import jax.numpy as jnp
from jax.experimental import pallas as pl
from jax.experimental.pallas import tpu as pltpu


# -----------------------------------------------------------------------------
# In-kernel im2col helpers: static shapes, unit-stride slices + concats only.
# -----------------------------------------------------------------------------
def _im2col_from_phase_split(xp, k, s, oh, ow):
    """xp: (H*s, ceil(W/s), C) column-phase-split input with
    xp[h*s + (w % s), w // s, c] == x[h, w, c].
    Returns (oh*ow, k*k*C) conv patches; columns ordered (kh, kw, c), rows
    ordered (y, x) row-major.  Every read is a contiguous slice."""
    out_rows = []
    for y in range(oh):
        taps = []
        for kh in range(k):
            for kw in range(k):
                r = (s * y + kh) * s + (kw % s)
                j0 = kw // s
                taps.append(xp[r, j0:j0 + ow, :])           # (ow, C)
        out_rows.append(jnp.concatenate(taps, axis=1))      # (ow, k*k*C)
    return jnp.concatenate(out_rows, axis=0)                 # (oh*ow, k*k*C)


def _im2col_from_rows(h, iw, k, s, oh, ow):
    """h: (ih*iw, C) activation, rows in (y, x) row-major order.
    Returns (oh*ow, k*k*C) conv patches; columns ordered (kh, kw, c)."""
    cols = []
    for kh in range(k):
        for kw in range(k):
            picks = []
            for y in range(oh):
                for x in range(ow):
                    r = (s * y + kh) * iw + (s * x + kw)
                    picks.append(h[r:r + 1, :])              # (1, C) static slice
            cols.append(jnp.concatenate(picks, axis=0))      # (oh*ow, C)
    return jnp.concatenate(cols, axis=1)                      # (oh*ow, k*k*C)


# -----------------------------------------------------------------------------
# Fused kernel: conv1/2/3 (+BN folded +ReLU) + dueling head, one image per step
# -----------------------------------------------------------------------------
def _dddqn_fused_kernel(xp_ref, w1_ref, b1_ref, w2_ref, b2_ref, w3_ref, b3_ref,
                        wfc_ref, bfc_ref, wq_ref, bq_ref, q_ref, *, geom):
    (k1, s1, oh1, ow1), (k2, s2, oh2, ow2), (k3, s3, oh3, ow3) = geom

    def mm(a, b):  # bf16 MXU operands, f32 accumulation
        return jnp.dot(a.astype(jnp.bfloat16), b, preferred_element_type=jnp.float32)

    # ---- conv1 (+BN+ReLU): in-kernel im2col from the phase-split input ------
    xp = xp_ref[...].astype(jnp.float32)                          # (H*s1, ceil(W/s1), Cin)
    p1 = _im2col_from_phase_split(xp, k1, s1, oh1, ow1)           # (oh1*ow1, k1^2*Cin)
    h1 = jnp.maximum(mm(p1, w1_ref[...]) + b1_ref[...], 0.0)      # (oh1*ow1, C1)

    # ---- conv2 (+BN+ReLU): static row-gather im2col, one K=k^2*C1 matmul ----
    p2 = _im2col_from_rows(h1, ow1, k2, s2, oh2, ow2)             # (oh2*ow2, k2^2*C1)
    h2 = jnp.maximum(mm(p2, w2_ref[...]) + b2_ref[...], 0.0)      # (oh2*ow2, C2)

    # ---- conv3 (+BN+ReLU) ----------------------------------------------------
    p3 = _im2col_from_rows(h2, ow2, k3, s3, oh3, ow3)             # (oh3*ow3, k3^2*C2)
    h3 = jnp.maximum(mm(p3, w3_ref[...]) + b3_ref[...], 0.0)      # (oh3*ow3, C3)

    # ---- dueling head --------------------------------------------------------
    # Merged value/advantage first FC (flatten permutation folded into wfc);
    # second FC + mean-subtract combine pre-folded into a single (2H, A_pad) matmul.
    hflat = jnp.concatenate([h3[p:p + 1, :] for p in range(h3.shape[0])], axis=1)  # (1, P*C3)
    hcat = jnp.maximum(mm(hflat, wfc_ref[...]) + bfc_ref[...], 0.0)                # (1, 2H)
    q_ref[...] = mm(hcat, wq_ref[...]) + bq_ref[...]                               # (1, A_pad)


# -----------------------------------------------------------------------------
# One-time parameter preparation (hoisted out of the jitted hot path)
# -----------------------------------------------------------------------------
def prepare_params(p, *, in_hw, strides, eps=1e-5):
    """Fold BN (eval mode) into weights/shifts, reshape conv weights to im2col
    matmul form, merge the dueling head into two matmuls (second one also folds
    the mean-subtract combine), and cast matmul weights to bf16.  Runs ONCE."""
    kers = [p[f"conv{i+1}_w"].shape[2] for i in range(3)]
    cins = [p[f"conv{i+1}_w"].shape[1] for i in range(3)]
    couts = [p[f"conv{i+1}_w"].shape[0] for i in range(3)]

    hh, ww = in_hw
    ohs, ows = [], []
    for i in range(3):
        hh = (hh - kers[i]) // strides[i] + 1
        ww = (ww - kers[i]) // strides[i] + 1
        ohs.append(hh)
        ows.append(ww)

    def bn_fold(i):
        scale = p[f"bn{i+1}_g"] / jnp.sqrt(p[f"bn{i+1}_rv"] + eps)
        shift = p[f"bn{i+1}_b"] + (p[f"conv{i+1}_b"] - p[f"bn{i+1}_rm"]) * scale
        return scale, shift

    def conv_mat(i):
        k = kers[i]
        # (Cout, Cin, kh, kw) -> (k*k*Cin, Cout), rows ordered (kh, kw, cin)
        return p[f"conv{i+1}_w"].transpose(2, 3, 1, 0).reshape(k * k * cins[i], couts[i])

    kp = {}
    for i in range(3):
        sc, sh = bn_fold(i)
        kp[f"w{i+1}"] = (conv_mat(i) * sc[None, :]).astype(jnp.bfloat16)
        kp[f"b{i+1}"] = sh.reshape(1, -1).astype(jnp.float32)

    # ---- dueling head --------------------------------------------------------
    c3 = couts[2]
    spatial = ohs[2] * ows[2]
    f_in = p["value_fc_w"].shape[1]
    assert f_in == c3 * spatial, (f_in, c3, spatial)
    hid = p["value_fc_w"].shape[0]
    a_dim = p["adv_w"].shape[0]
    apad = ((a_dim + 127) // 128) * 128          # lane-dense padded action dim

    # Merged first FC (F, 2H); PyTorch NCHW flatten order (c, y, x) regrouped to
    # the kernel's (y, x, c) activation layout.
    wcat = jnp.concatenate([p["value_fc_w"].T, p["adv_fc_w"].T], axis=1)          # (F, 2H)
    wcat = wcat.reshape(c3, spatial, 2 * hid).transpose(1, 0, 2).reshape(spatial * c3, 2 * hid)
    kp["wfc"] = wcat.astype(jnp.bfloat16)
    kp["bfc"] = jnp.concatenate([p["value_fc_b"], p["adv_fc_b"]]).reshape(1, -1).astype(jnp.float32)

    # Second FC + dueling combine folded into one matmul:
    #   Q = hcat @ Wq + bq,  Wq = [tile(Wv^T, A); Wa^T - colmean(Wa^T)]
    wv = jnp.tile(p["value_w"].T, (1, a_dim))                                     # (H, A)
    wa = p["adv_w"].T
    wa = wa - jnp.mean(wa, axis=1, keepdims=True)                                 # (H, A)
    wq = jnp.concatenate([wv, wa], axis=0)                                        # (2H, A)
    bq = p["value_b"][0] + p["adv_b"] - jnp.mean(p["adv_b"])                      # (A,)
    kp["wq"] = jnp.pad(wq, ((0, 0), (0, apad - a_dim))).astype(jnp.bfloat16)      # (2H, A_pad)
    kp["bq"] = jnp.pad(bq.reshape(1, -1), ((0, 0), (0, apad - a_dim))).astype(jnp.float32)
    return kp


# -----------------------------------------------------------------------------
# Jitted forward wrapper: NCHW input -> Q values (N, A)
# -----------------------------------------------------------------------------
def dddqn_forward(x_nchw, kp, *, kernels, strides, action_space):
    n, c, H, W = x_nchw.shape
    k1, k2, k3 = kernels
    s1, s2, s3 = strides
    oh1, ow1 = (H - k1) // s1 + 1, (W - k1) // s1 + 1
    oh2, ow2 = (oh1 - k2) // s2 + 1, (ow1 - k2) // s2 + 1
    oh3, ow3 = (oh2 - k3) // s3 + 1, (ow2 - k3) // s3 + 1

    # Column-phase-split NHWC layout: xp[n, h*s1 + (w % s1), w // s1, c] = x[n, h, w, c].
    # Pure re-layout (same byte count as the raw input), so every in-kernel
    # conv1 tap read is a contiguous, unit-stride slice.
    x = jnp.transpose(x_nchw, (0, 2, 3, 1))                   # NHWC
    wp = -(-W // s1)                                          # ceil(W / s1)
    if wp * s1 != W:
        x = jnp.pad(x, ((0, 0), (0, 0), (0, wp * s1 - W), (0, 0)))
    xp = (x.reshape(n, H, wp, s1, c)
            .transpose(0, 1, 3, 2, 4)
            .reshape(n, H * s1, wp, c)
            .astype(jnp.bfloat16))

    geom = ((k1, s1, oh1, ow1), (k2, s2, oh2, ow2), (k3, s3, oh3, ow3))
    kern = functools.partial(_dddqn_fused_kernel, geom=geom)

    apad = kp["bq"].shape[1]

    def full(a):  # whole-array resident block (all non-batch dims full extent)
        return pl.BlockSpec(a.shape, lambda i: (0,) * a.ndim)

    out = pl.pallas_call(
        kern,
        out_shape=jax.ShapeDtypeStruct((n, 1, apad), jnp.float32),
        grid=(n,),
        in_specs=[
            pl.BlockSpec((None, H * s1, wp, c), lambda i: (i, 0, 0, 0)),
            full(kp["w1"]), full(kp["b1"]),
            full(kp["w2"]), full(kp["b2"]),
            full(kp["w3"]), full(kp["b3"]),
            full(kp["wfc"]), full(kp["bfc"]),
            full(kp["wq"]), full(kp["bq"]),
        ],
        out_specs=pl.BlockSpec((None, 1, apad), lambda i: (i, 0, 0)),
        compiler_params=pltpu.CompilerParams(
            dimension_semantics=("parallel",),
            vmem_limit_bytes=32 * 1024 * 1024),
    )(xp, kp["w1"], kp["b1"], kp["w2"], kp["b2"], kp["w3"], kp["b3"],
      kp["wfc"], kp["bfc"], kp["wq"], kp["bq"])
    return out[:, 0, :action_space]


# -----------------------------------------------------------------------------
# Deterministic parameter construction
# -----------------------------------------------------------------------------
def make_params(key, n_frames, out_channels, kernels, fc_size, action_space):
    keys = iter(jax.random.split(key, 64))

    def init(shape, scale=0.1):
        return (scale * jax.random.normal(next(keys), shape)).astype(jnp.float32)

    p = {}
    chans = [n_frames] + list(out_channels)
    for i in range(3):
        cout, cin, k = out_channels[i], chans[i], kernels[i]
        p[f"conv{i+1}_w"] = init((cout, cin, k, k))
        p[f"conv{i+1}_b"] = init((cout,))
        p[f"bn{i+1}_g"] = (1.0 + 0.1 * jax.random.normal(next(keys), (cout,))).astype(jnp.float32)
        p[f"bn{i+1}_b"] = init((cout,))
        p[f"bn{i+1}_rm"] = init((cout,))
        p[f"bn{i+1}_rv"] = (1.0 + jnp.abs(0.1 * jax.random.normal(next(keys), (cout,)))).astype(jnp.float32)

    f_in, f_hid = fc_size
    p["value_fc_w"] = init((f_hid, f_in))
    p["value_fc_b"] = init((f_hid,))
    p["value_w"] = init((1, f_hid))
    p["value_b"] = init((1,))
    p["adv_fc_w"] = init((f_hid, f_in))
    p["adv_fc_b"] = init((f_hid,))
    p["adv_w"] = init((action_space, f_hid))
    p["adv_b"] = init((action_space,))
    return p


# -----------------------------------------------------------------------------
# Pure-JAX f32 reference (eval-mode BN semantics) for validation
# -----------------------------------------------------------------------------
def reference_forward(x, p, strides, eps=1e-5):
    def conv_bn_relu(h, i, s):
        y = jax.lax.conv_general_dilated(h, p[f"conv{i}_w"], (s, s), "VALID",
                                         dimension_numbers=("NCHW", "OIHW", "NCHW"))
        y = y + p[f"conv{i}_b"][None, :, None, None]
        scale = (p[f"bn{i}_g"] / jnp.sqrt(p[f"bn{i}_rv"] + eps))[None, :, None, None]
        y = (y - p[f"bn{i}_rm"][None, :, None, None]) * scale + p[f"bn{i}_b"][None, :, None, None]
        return jnp.maximum(y, 0.0)

    h = conv_bn_relu(x, 1, strides[0])
    h = conv_bn_relu(h, 2, strides[1])
    h = conv_bn_relu(h, 3, strides[2])
    hf = h.reshape(h.shape[0], -1)
    v = jnp.maximum(hf @ p["value_fc_w"].T + p["value_fc_b"], 0.0)
    v = v @ p["value_w"].T + p["value_b"]
    a = jnp.maximum(hf @ p["adv_fc_w"].T + p["adv_fc_b"], 0.0)
    a = a @ p["adv_w"].T + p["adv_b"]
    return v + (a - jnp.mean(a, axis=1, keepdims=True))


# -----------------------------------------------------------------------------
if __name__ == "__main__":
    batch_size = 2
    action_space = 4
    n_frames_input = 4
    kernels_size = [3, 3, 3]
    out_channels = [8, 16, 16]
    strides = [2, 2, 1]
    in_hw = (16, 16)
    # 16x16 -(k3,s2)-> 7x7 -(k3,s2)-> 3x3 -(k3,s1)-> 1x1 ; flatten = 16*1*1 = 16
    fc_size = [16, 32]

    key = jax.random.PRNGKey(0)
    k_x, k_p = jax.random.split(key)
    x = jax.random.normal(k_x, (batch_size, n_frames_input, *in_hw), dtype=jnp.float32)
    raw = make_params(k_p, n_frames_input, out_channels, kernels_size, fc_size, action_space)

    # One-time prep: BN fold, im2col weight layout, bf16 cast, dueling-head fold.
    kp = prepare_params(raw, in_hw=in_hw, strides=tuple(strides))

    fwd = jax.jit(functools.partial(dddqn_forward,
                                    kernels=tuple(kernels_size),
                                    strides=tuple(strides),
                                    action_space=action_space))
    q = fwd(x, kp)
    jax.block_until_ready(q)

    assert q.shape == (batch_size, action_space), q.shape
    assert bool(jnp.all(jnp.isfinite(q)))

    # bf16 MXU operands vs. f32 reference -> tolerance-based check.
    q_ref = reference_forward(x, raw, strides)
    assert bool(jnp.allclose(q, q_ref, rtol=5e-2, atol=3e-2)), (q, q_ref)

    print("KERNEL_OK")
</pallas_src>

<mosaic_0001>
module attributes {stable_mosaic.version = 11 : i64} {
  func.func @_dddqn_fused_kernel(%arg0: i32, %arg1: memref<1x32x8x4xbf16, #tpu.memory_space<vmem>>, %arg2: memref<36x8xbf16, #tpu.memory_space<vmem>>, %arg3: memref<1x8xf32, #tpu.memory_space<vmem>>, %arg4: memref<72x16xbf16, #tpu.memory_space<vmem>>, %arg5: memref<1x16xf32, #tpu.memory_space<vmem>>, %arg6: memref<144x16xbf16, #tpu.memory_space<vmem>>, %arg7: memref<1x16xf32, #tpu.memory_space<vmem>>, %arg8: memref<16x64xbf16, #tpu.memory_space<vmem>>, %arg9: memref<1x64xf32, #tpu.memory_space<vmem>>, %arg10: memref<64x128xbf16, #tpu.memory_space<vmem>>, %arg11: memref<1x128xf32, #tpu.memory_space<vmem>>, %arg12: memref<1x1x128xf32, #tpu.memory_space<vmem>>) attributes {dimension_semantics = [#tpu.dimension_semantics<parallel>], iteration_bounds = array<i64: 2>, scalar_prefetch = 0 : i64, scratch_operands = 0 : i64, tpu.core_type = #tpu.core_type<tc>, window_params = [{transform_indices = @transform_0, window_bounds = array<i64: 1, 32, 8, 4>}, {pipeline_mode = #tpu.pipeline_mode<synchronous>, transform_indices = @transform_1, window_bounds = array<i64: 36, 8>}, {pipeline_mode = #tpu.pipeline_mode<synchronous>, transform_indices = @transform_2, window_bounds = array<i64: 1, 8>}, {pipeline_mode = #tpu.pipeline_mode<synchronous>, transform_indices = @transform_3, window_bounds = array<i64: 72, 16>}, {pipeline_mode = #tpu.pipeline_mode<synchronous>, transform_indices = @transform_4, window_bounds = array<i64: 1, 16>}, {pipeline_mode = #tpu.pipeline_mode<synchronous>, transform_indices = @transform_5, window_bounds = array<i64: 144, 16>}, {pipeline_mode = #tpu.pipeline_mode<synchronous>, transform_indices = @transform_6, window_bounds = array<i64: 1, 16>}, {pipeline_mode = #tpu.pipeline_mode<synchronous>, transform_indices = @transform_7, window_bounds = array<i64: 16, 64>}, {pipeline_mode = #tpu.pipeline_mode<synchronous>, transform_indices = @transform_8, window_bounds = array<i64: 1, 64>}, {pipeline_mode = #tpu.pipeline_mode<synchronous>, transform_indices = @transform_9, window_bounds = array<i64: 64, 128>}, {pipeline_mode = #tpu.pipeline_mode<synchronous>, transform_indices = @transform_10, window_bounds = array<i64: 1, 128>}, {transform_indices = @transform_11, window_bounds = array<i64: 1, 1, 128>}]} {
    %c0 = arith.constant 0 : index
    %c0_0 = arith.constant 0 : index
    %c0_1 = arith.constant 0 : index
    %c0_2 = arith.constant 0 : index
    %0 = vector.load %arg1[%c0, %c0_0, %c0_1, %c0_2] : memref<1x32x8x4xbf16, #tpu.memory_space<vmem>>, vector<1x32x8x4xbf16>
    %1 = vector.shape_cast %0 : vector<1x32x8x4xbf16> to vector<32x8x4xbf16>
    %2 = arith.extf %1 : vector<32x8x4xbf16> to vector<32x8x4xf32>
    %3 = vector.extract_strided_slice %2 {offsets = [0, 0, 0], sizes = [1, 7, 4], strides = [1, 1, 1]} : vector<32x8x4xf32> to vector<1x7x4xf32>
    %4 = vector.shape_cast %3 : vector<1x7x4xf32> to vector<7x4xf32>
    %5 = vector.extract_strided_slice %2 {offsets = [1, 0, 0], sizes = [1, 7, 4], strides = [1, 1, 1]} : vector<32x8x4xf32> to vector<1x7x4xf32>
    %6 = vector.shape_cast %5 : vector<1x7x4xf32> to vector<7x4xf32>
    %7 = vector.extract_strided_slice %2 {offsets = [0, 1, 0], sizes = [1, 7, 4], strides = [1, 1, 1]} : vector<32x8x4xf32> to vector<1x7x4xf32>
    %8 = vector.shape_cast %7 : vector<1x7x4xf32> to vector<7x4xf32>
    %9 = vector.extract_strided_slice %2 {offsets = [2, 0, 0], sizes = [1, 7, 4], strides = [1, 1, 1]} : vector<32x8x4xf32> to vector<1x7x4xf32>
    %10 = vector.shape_cast %9 : vector<1x7x4xf32> to vector<7x4xf32>
    %11 = vector.extract_strided_slice %2 {offsets = [3, 0, 0], sizes = [1, 7, 4], strides = [1, 1, 1]} : vector<32x8x4xf32> to vector<1x7x4xf32>
    %12 = vector.shape_cast %11 : vector<1x7x4xf32> to vector<7x4xf32>
    %13 = vector.extract_strided_slice %2 {offsets = [2, 1, 0], sizes = [1, 7, 4], strides = [1, 1, 1]} : vector<32x8x4xf32> to vector<1x7x4xf32>
    %14 = vector.shape_cast %13 : vector<1x7x4xf32> to vector<7x4xf32>
    %15 = vector.extract_strided_slice %2 {offsets = [4, 0, 0], sizes = [1, 7, 4], strides = [1, 1, 1]} : vector<32x8x4xf32> to vector<1x7x4xf32>
    %16 = vector.shape_cast %15 : vector<1x7x4xf32> to vector<7x4xf32>
    %17 = vector.extract_strided_slice %2 {offsets = [5, 0, 0], sizes = [1, 7, 4], strides = [1, 1, 1]} : vector<32x8x4xf32> to vector<1x7x4xf32>
    %18 = vector.shape_cast %17 : vector<1x7x4xf32> to vector<7x4xf32>
    %19 = vector.extract_strided_slice %2 {offsets = [4, 1, 0], sizes = [1, 7, 4], strides = [1, 1, 1]} : vector<32x8x4xf32> to vector<1x7x4xf32>
    %20 = vector.shape_cast %19 : vector<1x7x4xf32> to vector<7x4xf32>
    %21 = tpu.concatenate %4, %6, %8, %10, %12, %14, %16, %18, %20 in 1 : vector<7x4xf32>, vector<7x4xf32>, vector<7x4xf32>, vector<7x4xf32>, vector<7x4xf32>, vector<7x4xf32>, vector<7x4xf32>, vector<7x4xf32>, vector<7x4xf32> -> vector<7x36xf32>
    %22 = vector.extract_strided_slice %2 {offsets = [4, 0, 0], sizes = [1, 7, 4], strides = [1, 1, 1]} : vector<32x8x4xf32> to vector<1x7x4xf32>
    %23 = vector.shape_cast %22 : vector<1x7x4xf32> to vector<7x4xf32>
    %24 = vector.extract_strided_slice %2 {offsets = [5, 0, 0], sizes = [1, 7, 4], strides = [1, 1, 1]} : vector<32x8x4xf32> to vector<1x7x4xf32>
    %25 = vector.shape_cast %24 : vector<1x7x4xf32> to vector<7x4xf32>
    %26 = vector.extract_strided_slice %2 {offsets = [4, 1, 0], sizes = [1, 7, 4], strides = [1, 1, 1]} : vector<32x8x4xf32> to vector<1x7x4xf32>
    %27 = vector.shape_cast %26 : vector<1x7x4xf32> to vector<7x4xf32>
    %28 = vector.extract_strided_slice %2 {offsets = [6, 0, 0], sizes = [1, 7, 4], strides = [1, 1, 1]} : vector<32x8x4xf32> to vector<1x7x4xf32>
    %29 = vector.shape_cast %28 : vector<1x7x4xf32> to vector<7x4xf32>
    %30 = vector.extract_strided_slice %2 {offsets = [7, 0, 0], sizes = [1, 7, 4], strides = [1, 1, 1]} : vector<32x8x4xf32> to vector<1x7x4xf32>
    %31 = vector.shape_cast %30 : vector<1x7x4xf32> to vector<7x4xf32>
    %32 = vector.extract_strided_slice %2 {offsets = [6, 1, 0], sizes = [1, 7, 4], strides = [1, 1, 1]} : vector<32x8x4xf32> to vector<1x7x4xf32>
    %33 = vector.shape_cast %32 : vector<1x7x4xf32> to vector<7x4xf32>
    %34 = vector.extract_strided_slice %2 {offsets = [8, 0, 0], sizes = [1, 7, 4], strides = [1, 1, 1]} : vector<32x8x4xf32> to vector<1x7x4xf32>
    %35 = vector.shape_cast %34 : vector<1x7x4xf32> to vector<7x4xf32>
    %36 = vector.extract_strided_slice %2 {offsets = [9, 0, 0], sizes = [1, 7, 4], strides = [1, 1, 1]} : vector<32x8x4xf32> to vector<1x7x4xf32>
    %37 = vector.shape_cast %36 : vector<1x7x4xf32> to vector<7x4xf32>
    %38 = vector.extract_strided_slice %2 {offsets = [8, 1, 0], sizes = [1, 7, 4], strides = [1, 1, 1]} : vector<32x8x4xf32> to vector<1x7x4xf32>
    %39 = vector.shape_cast %38 : vector<1x7x4xf32> to vector<7x4xf32>
    %40 = tpu.concatenate %23, %25, %27, %29, %31, %33, %35, %37, %39 in 1 : vector<7x4xf32>, vector<7x4xf32>, vector<7x4xf32>, vector<7x4xf32>, vector<7x4xf32>, vector<7x4xf32>, vector<7x4xf32>, vector<7x4xf32>, vector<7x4xf32> -> vector<7x36xf32>
    %41 = vector.extract_strided_slice %2 {offsets = [8, 0, 0], sizes = [1, 7, 4], strides = [1, 1, 1]} : vector<32x8x4xf32> to vector<1x7x4xf32>
    %42 = vector.shape_cast %41 : vector<1x7x4xf32> to vector<7x4xf32>
    %43 = vector.extract_strided_slice %2 {offsets = [9, 0, 0], sizes = [1, 7, 4], strides = [1, 1, 1]} : vector<32x8x4xf32> to vector<1x7x4xf32>
    %44 = vector.shape_cast %43 : vector<1x7x4xf32> to vector<7x4xf32>
    %45 = vector.extract_strided_slice %2 {offsets = [8, 1, 0], sizes = [1, 7, 4], strides = [1, 1, 1]} : vector<32x8x4xf32> to vector<1x7x4xf32>
    %46 = vector.shape_cast %45 : vector<1x7x4xf32> to vector<7x4xf32>
    %47 = vector.extract_strided_slice %2 {offsets = [10, 0, 0], sizes = [1, 7, 4], strides = [1, 1, 1]} : vector<32x8x4xf32> to vector<1x7x4xf32>
    %48 = vector.shape_cast %47 : vector<1x7x4xf32> to vector<7x4xf32>
    %49 = vector.extract_strided_slice %2 {offsets = [11, 0, 0], sizes = [1, 7, 4], strides = [1, 1, 1]} : vector<32x8x4xf32> to vector<1x7x4xf32>
    %50 = vector.shape_cast %49 : vector<1x7x4xf32> to vector<7x4xf32>
    %51 = vector.extract_strided_slice %2 {offsets = [10, 1, 0], sizes = [1, 7, 4], strides = [1, 1, 1]} : vector<32x8x4xf32> to vector<1x7x4xf32>
    %52 = vector.shape_cast %51 : vector<1x7x4xf32> to vector<7x4xf32>
    %53 = vector.extract_strided_slice %2 {offsets = [12, 0, 0], sizes = [1, 7, 4], strides = [1, 1, 1]} : vector<32x8x4xf32> to vector<1x7x4xf32>
    %54 = vector.shape_cast %53 : vector<1x7x4xf32> to vector<7x4xf32>
    %55 = vector.extract_strided_slice %2 {offsets = [13, 0, 0], sizes = [1, 7, 4], strides = [1, 1, 1]} : vector<32x8x4xf32> to vector<1x7x4xf32>
    %56 = vector.shape_cast %55 : vector<1x7x4xf32> to vector<7x4xf32>
    %57 = vector.extract_strided_slice %2 {offsets = [12, 1, 0], sizes = [1, 7, 4], strides = [1, 1, 1]} : vector<32x8x4xf32> to vector<1x7x4xf32>
    %58 = vector.shape_cast %57 : vector<1x7x4xf32> to vector<7x4xf32>
    %59 = tpu.concatenate %42, %44, %46, %48, %50, %52, %54, %56, %58 in 1 : vector<7x4xf32>, vector<7x4xf32>, vector<7x4xf32>, vector<7x4xf32>, vector<7x4xf32>, vector<7x4xf32>, vector<7x4xf32>, vector<7x4xf32>, vector<7x4xf32> -> vector<7x36xf32>
    %60 = vector.extract_strided_slice %2 {offsets = [12, 0, 0], sizes = [1, 7, 4], strides = [1, 1, 1]} : vector<32x8x4xf32> to vector<1x7x4xf32>
    %61 = vector.shape_cast %60 : vector<1x7x4xf32> to vector<7x4xf32>
    %62 = vector.extract_strided_slice %2 {offsets = [13, 0, 0], sizes = [1, 7, 4], strides = [1, 1, 1]} : vector<32x8x4xf32> to vector<1x7x4xf32>
    %63 = vector.shape_cast %62 : vector<1x7x4xf32> to vector<7x4xf32>
    %64 = vector.extract_strided_slice %2 {offsets = [12, 1, 0], sizes = [1, 7, 4], strides = [1, 1, 1]} : vector<32x8x4xf32> to vector<1x7x4xf32>
    %65 = vector.shape_cast %64 : vector<1x7x4xf32> to vector<7x4xf32>
    %66 = vector.extract_strided_slice %2 {offsets = [14, 0, 0], sizes = [1, 7, 4], strides = [1, 1, 1]} : vector<32x8x4xf32> to vector<1x7x4xf32>
    %67 = vector.shape_cast %66 : vector<1x7x4xf32> to vector<7x4xf32>
    %68 = vector.extract_strided_slice %2 {offsets = [15, 0, 0], sizes = [1, 7, 4], strides = [1, 1, 1]} : vector<32x8x4xf32> to vector<1x7x4xf32>
    %69 = vector.shape_cast %68 : vector<1x7x4xf32> to vector<7x4xf32>
    %70 = vector.extract_strided_slice %2 {offsets = [14, 1, 0], sizes = [1, 7, 4], strides = [1, 1, 1]} : vector<32x8x4xf32> to vector<1x7x4xf32>
    %71 = vector.shape_cast %70 : vector<1x7x4xf32> to vector<7x4xf32>
    %72 = vector.extract_strided_slice %2 {offsets = [16, 0, 0], sizes = [1, 7, 4], strides = [1, 1, 1]} : vector<32x8x4xf32> to vector<1x7x4xf32>
    %73 = vector.shape_cast %72 : vector<1x7x4xf32> to vector<7x4xf32>
    %74 = vector.extract_strided_slice %2 {offsets = [17, 0, 0], sizes = [1, 7, 4], strides = [1, 1, 1]} : vector<32x8x4xf32> to vector<1x7x4xf32>
    %75 = vector.shape_cast %74 : vector<1x7x4xf32> to vector<7x4xf32>
    %76 = vector.extract_strided_slice %2 {offsets = [16, 1, 0], sizes = [1, 7, 4], strides = [1, 1, 1]} : vector<32x8x4xf32> to vector<1x7x4xf32>
    %77 = vector.shape_cast %76 : vector<1x7x4xf32> to vector<7x4xf32>
    %78 = tpu.concatenate %61, %63, %65, %67, %69, %71, %73, %75, %77 in 1 : vector<7x4xf32>, vector<7x4xf32>, vector<7x4xf32>, vector<7x4xf32>, vector<7x4xf32>, vector<7x4xf32>, vector<7x4xf32>, vector<7x4xf32>, vector<7x4xf32> -> vector<7x36xf32>
    %79 = vector.extract_strided_slice %2 {offsets = [16, 0, 0], sizes = [1, 7, 4], strides = [1, 1, 1]} : vector<32x8x4xf32> to vector<1x7x4xf32>
    %80 = vector.shape_cast %79 : vector<1x7x4xf32> to vector<7x4xf32>
    %81 = vector.extract_strided_slice %2 {offsets = [17, 0, 0], sizes = [1, 7, 4], strides = [1, 1, 1]} : vector<32x8x4xf32> to vector<1x7x4xf32>
    %82 = vector.shape_cast %81 : vector<1x7x4xf32> to vector<7x4xf32>
    %83 = vector.extract_strided_slice %2 {offsets = [16, 1, 0], sizes = [1, 7, 4], strides = [1, 1, 1]} : vector<32x8x4xf32> to vector<1x7x4xf32>
    %84 = vector.shape_cast %83 : vector<1x7x4xf32> to vector<7x4xf32>
    %85 = vector.extract_strided_slice %2 {offsets = [18, 0, 0], sizes = [1, 7, 4], strides = [1, 1, 1]} : vector<32x8x4xf32> to vector<1x7x4xf32>
    %86 = vector.shape_cast %85 : vector<1x7x4xf32> to vector<7x4xf32>
    %87 = vector.extract_strided_slice %2 {offsets = [19, 0, 0], sizes = [1, 7, 4], strides = [1, 1, 1]} : vector<32x8x4xf32> to vector<1x7x4xf32>
    %88 = vector.shape_cast %87 : vector<1x7x4xf32> to vector<7x4xf32>
    %89 = vector.extract_strided_slice %2 {offsets = [18, 1, 0], sizes = [1, 7, 4], strides = [1, 1, 1]} : vector<32x8x4xf32> to vector<1x7x4xf32>
    %90 = vector.shape_cast %89 : vector<1x7x4xf32> to vector<7x4xf32>
    %91 = vector.extract_strided_slice %2 {offsets = [20, 0, 0], sizes = [1, 7, 4], strides = [1, 1, 1]} : vector<32x8x4xf32> to vector<1x7x4xf32>
    %92 = vector.shape_cast %91 : vector<1x7x4xf32> to vector<7x4xf32>
    %93 = vector.extract_strided_slice %2 {offsets = [21, 0, 0], sizes = [1, 7, 4], strides = [1, 1, 1]} : vector<32x8x4xf32> to vector<1x7x4xf32>
    %94 = vector.shape_cast %93 : vector<1x7x4xf32> to vector<7x4xf32>
    %95 = vector.extract_strided_slice %2 {offsets = [20, 1, 0], sizes = [1, 7, 4], strides = [1, 1, 1]} : vector<32x8x4xf32> to vector<1x7x4xf32>
    %96 = vector.shape_cast %95 : vector<1x7x4xf32> to vector<7x4xf32>
    %97 = tpu.concatenate %80, %82, %84, %86, %88, %90, %92, %94, %96 in 1 : vector<7x4xf32>, vector<7x4xf32>, vector<7x4xf32>, vector<7x4xf32>, vector<7x4xf32>, vector<7x4xf32>, vector<7x4xf32>, vector<7x4xf32>, vector<7x4xf32> -> vector<7x36xf32>
    %98 = vector.extract_strided_slice %2 {offsets = [20, 0, 0], sizes = [1, 7, 4], strides = [1, 1, 1]} : vector<32x8x4xf32> to vector<1x7x4xf32>
    %99 = vector.shape_cast %98 : vector<1x7x4xf32> to vector<7x4xf32>
    %100 = vector.extract_strided_slice %2 {offsets = [21, 0, 0], sizes = [1, 7, 4], strides = [1, 1, 1]} : vector<32x8x4xf32> to vector<1x7x4xf32>
    %101 = vector.shape_cast %100 : vector<1x7x4xf32> to vector<7x4xf32>
    %102 = vector.extract_strided_slice %2 {offsets = [20, 1, 0], sizes = [1, 7, 4], strides = [1, 1, 1]} : vector<32x8x4xf32> to vector<1x7x4xf32>
    %103 = vector.shape_cast %102 : vector<1x7x4xf32> to vector<7x4xf32>
    %104 = vector.extract_strided_slice %2 {offsets = [22, 0, 0], sizes = [1, 7, 4], strides = [1, 1, 1]} : vector<32x8x4xf32> to vector<1x7x4xf32>
    %105 = vector.shape_cast %104 : vector<1x7x4xf32> to vector<7x4xf32>
    %106 = vector.extract_strided_slice %2 {offsets = [23, 0, 0], sizes = [1, 7, 4], strides = [1, 1, 1]} : vector<32x8x4xf32> to vector<1x7x4xf32>
    %107 = vector.shape_cast %106 : vector<1x7x4xf32> to vector<7x4xf32>
    %108 = vector.extract_strided_slice %2 {offsets = [22, 1, 0], sizes = [1, 7, 4], strides = [1, 1, 1]} : vector<32x8x4xf32> to vector<1x7x4xf32>
    %109 = vector.shape_cast %108 : vector<1x7x4xf32> to vector<7x4xf32>
    %110 = vector.extract_strided_slice %2 {offsets = [24, 0, 0], sizes = [1, 7, 4], strides = [1, 1, 1]} : vector<32x8x4xf32> to vector<1x7x4xf32>
    %111 = vector.shape_cast %110 : vector<1x7x4xf32> to vector<7x4xf32>
    %112 = vector.extract_strided_slice %2 {offsets = [25, 0, 0], sizes = [1, 7, 4], strides = [1, 1, 1]} : vector<32x8x4xf32> to vector<1x7x4xf32>
    %113 = vector.shape_cast %112 : vector<1x7x4xf32> to vector<7x4xf32>
    %114 = vector.extract_strided_slice %2 {offsets = [24, 1, 0], sizes = [1, 7, 4], strides = [1, 1, 1]} : vector<32x8x4xf32> to vector<1x7x4xf32>
    %115 = vector.shape_cast %114 : vector<1x7x4xf32> to vector<7x4xf32>
    %116 = tpu.concatenate %99, %101, %103, %105, %107, %109, %111, %113, %115 in 1 : vector<7x4xf32>, vector<7x4xf32>, vector<7x4xf32>, vector<7x4xf32>, vector<7x4xf32>, vector<7x4xf32>, vector<7x4xf32>, vector<7x4xf32>, vector<7x4xf32> -> vector<7x36xf32>
    %117 = vector.extract_strided_slice %2 {offsets = [24, 0, 0], sizes = [1, 7, 4], strides = [1, 1, 1]} : vector<32x8x4xf32> to vector<1x7x4xf32>
    %118 = vector.shape_cast %117 : vector<1x7x4xf32> to vector<7x4xf32>
    %119 = vector.extract_strided_slice %2 {offsets = [25, 0, 0], sizes = [1, 7, 4], strides = [1, 1, 1]} : vector<32x8x4xf32> to vector<1x7x4xf32>
    %120 = vector.shape_cast %119 : vector<1x7x4xf32> to vector<7x4xf32>
    %121 = vector.extract_strided_slice %2 {offsets = [24, 1, 0], sizes = [1, 7, 4], strides = [1, 1, 1]} : vector<32x8x4xf32> to vector<1x7x4xf32>
    %122 = vector.shape_cast %121 : vector<1x7x4xf32> to vector<7x4xf32>
    %123 = vector.extract_strided_slice %2 {offsets = [26, 0, 0], sizes = [1, 7, 4], strides = [1, 1, 1]} : vector<32x8x4xf32> to vector<1x7x4xf32>
    %124 = vector.shape_cast %123 : vector<1x7x4xf32> to vector<7x4xf32>
    %125 = vector.extract_strided_slice %2 {offsets = [27, 0, 0], sizes = [1, 7, 4], strides = [1, 1, 1]} : vector<32x8x4xf32> to vector<1x7x4xf32>
    %126 = vector.shape_cast %125 : vector<1x7x4xf32> to vector<7x4xf32>
    %127 = vector.extract_strided_slice %2 {offsets = [26, 1, 0], sizes = [1, 7, 4], strides = [1, 1, 1]} : vector<32x8x4xf32> to vector<1x7x4xf32>
    %128 = vector.shape_cast %127 : vector<1x7x4xf32> to vector<7x4xf32>
    %129 = vector.extract_strided_slice %2 {offsets = [28, 0, 0], sizes = [1, 7, 4], strides = [1, 1, 1]} : vector<32x8x4xf32> to vector<1x7x4xf32>
    %130 = vector.shape_cast %129 : vector<1x7x4xf32> to vector<7x4xf32>
    %131 = vector.extract_strided_slice %2 {offsets = [29, 0, 0], sizes = [1, 7, 4], strides = [1, 1, 1]} : vector<32x8x4xf32> to vector<1x7x4xf32>
    %132 = vector.shape_cast %131 : vector<1x7x4xf32> to vector<7x4xf32>
    %133 = vector.extract_strided_slice %2 {offsets = [28, 1, 0], sizes = [1, 7, 4], strides = [1, 1, 1]} : vector<32x8x4xf32> to vector<1x7x4xf32>
    %134 = vector.shape_cast %133 : vector<1x7x4xf32> to vector<7x4xf32>
    %135 = tpu.concatenate %118, %120, %122, %124, %126, %128, %130, %132, %134 in 1 : vector<7x4xf32>, vector<7x4xf32>, vector<7x4xf32>, vector<7x4xf32>, vector<7x4xf32>, vector<7x4xf32>, vector<7x4xf32>, vector<7x4xf32>, vector<7x4xf32> -> vector<7x36xf32>
    %136 = tpu.concatenate %21, %40, %59, %78, %97, %116, %135 in 0 : vector<7x36xf32>, vector<7x36xf32>, vector<7x36xf32>, vector<7x36xf32>, vector<7x36xf32>, vector<7x36xf32>, vector<7x36xf32> -> vector<49x36xf32>
    %c0_3 = arith.constant 0 : index
    %c0_4 = arith.constant 0 : index
    %137 = vector.load %arg2[%c0_3, %c0_4] : memref<36x8xbf16, #tpu.memory_space<vmem>>, vector<36x8xbf16>
    %138 = arith.truncf %136 : vector<49x36xf32> to vector<49x36xbf16>
    %cst = arith.constant dense<0.000000e+00> : vector<49x8xf32>
    %139 = tpu.matmul %138, %137, %cst {dimension_numbers = #tpu.dot_dimension_numbers<[1], [0], [0], [1], [0, 0, 1, 1], [], []>} : vector<49x36xbf16>, vector<36x8xbf16>, vector<49x8xf32> -> vector<49x8xf32>
    %c0_5 = arith.constant 0 : index
    %c0_6 = arith.constant 0 : index
    %140 = vector.load %arg3[%c0_5, %c0_6] : memref<1x8xf32, #tpu.memory_space<vmem>>, vector<1x8xf32>
    %141 = vector.broadcast %140 : vector<1x8xf32> to vector<49x8xf32>
    %142 = arith.addf %139, %141 : vector<49x8xf32>
    %cst_7 = arith.constant 0.000000e+00 : f32
    %143 = vector.broadcast %cst_7 : f32 to vector<49x8xf32>
    %144 = arith.maximumf %142, %143 : vector<49x8xf32>
    %145 = vector.extract_strided_slice %144 {offsets = [0, 0], sizes = [1, 8], strides = [1, 1]} : vector<49x8xf32> to vector<1x8xf32>
    %146 = vector.extract_strided_slice %144 {offsets = [2, 0], sizes = [1, 8], strides = [1, 1]} : vector<49x8xf32> to vector<1x8xf32>
    %147 = vector.extract_strided_slice %144 {offsets = [4, 0], sizes = [1, 8], strides = [1, 1]} : vector<49x8xf32> to vector<1x8xf32>
    %148 = vector.extract_strided_slice %144 {offsets = [14, 0], sizes = [1, 8], strides = [1, 1]} : vector<49x8xf32> to vector<1x8xf32>
    %149 = vector.extract_strided_slice %144 {offsets = [16, 0], sizes = [1, 8], strides = [1, 1]} : vector<49x8xf32> to vector<1x8xf32>
    %150 = vector.extract_strided_slice %144 {offsets = [18, 0], sizes = [1, 8], strides = [1, 1]} : vector<49x8xf32> to vector<1x8xf32>
    %151 = vector.extract_strided_slice %144 {offsets = [28, 0], sizes = [1, 8], strides = [1, 1]} : vector<49x8xf32> to vector<1x8xf32>
    %152 = vector.extract_strided_slice %144 {offsets = [30, 0], sizes = [1, 8], strides = [1, 1]} : vector<49x8xf32> to vector<1x8xf32>
    %153 = vector.extract_strided_slice %144 {offsets = [32, 0], sizes = [1, 8], strides = [1, 1]} : vector<49x8xf32> to vector<1x8xf32>
    %154 = tpu.concatenate %145, %146, %147, %148, %149, %150, %151, %152, %153 in 0 : vector<1x8xf32>, vector<1x8xf32>, vector<1x8xf32>, vector<1x8xf32>, vector<1x8xf32>, vector<1x8xf32>, vector<1x8xf32>, vector<1x8xf32>, vector<1x8xf32> -> vector<9x8xf32>
    %155 = vector.extract_strided_slice %144 {offsets = [1, 0], sizes = [1, 8], strides = [1, 1]} : vector<49x8xf32> to vector<1x8xf32>
    %156 = vector.extract_strided_slice %144 {offsets = [3, 0], sizes = [1, 8], strides = [1, 1]} : vector<49x8xf32> to vector<1x8xf32>
    %157 = vector.extract_strided_slice %144 {offsets = [5, 0], sizes = [1, 8], strides = [1, 1]} : vector<49x8xf32> to vector<1x8xf32>
    %158 = vector.extract_strided_slice %144 {offsets = [15, 0], sizes = [1, 8], strides = [1, 1]} : vector<49x8xf32> to vector<1x8xf32>
    %159 = vector.extract_strided_slice %144 {offsets = [17, 0], sizes = [1, 8], strides = [1, 1]} : vector<49x8xf32> to vector<1x8xf32>
    %160 = vector.extract_strided_slice %144 {offsets = [19, 0], sizes = [1, 8], strides = [1, 1]} : vector<49x8xf32> to vector<1x8xf32>
    %161 = vector.extract_strided_slice %144 {offsets = [29, 0], sizes = [1, 8], strides = [1, 1]} : vector<49x8xf32> to vector<1x8xf32>
    %162 = vector.extract_strided_slice %144 {offsets = [31, 0], sizes = [1, 8], strides = [1, 1]} : vector<49x8xf32> to vector<1x8xf32>
    %163 = vector.extract_strided_slice %144 {offsets = [33, 0], sizes = [1, 8], strides = [1, 1]} : vector<49x8xf32> to vector<1x8xf32>
    %164 = tpu.concatenate %155, %156, %157, %158, %159, %160, %161, %162, %163 in 0 : vector<1x8xf32>, vector<1x8xf32>, vector<1x8xf32>, vector<1x8xf32>, vector<1x8xf32>, vector<1x8xf32>, vector<1x8xf32>, vector<1x8xf32>, vector<1x8xf32> -> vector<9x8xf32>
    %165 = vector.extract_strided_slice %144 {offsets = [2, 0], sizes = [1, 8], strides = [1, 1]} : vector<49x8xf32> to vector<1x8xf32>
    %166 = vector.extract_strided_slice %144 {offsets = [4, 0], sizes = [1, 8], strides = [1, 1]} : vector<49x8xf32> to vector<1x8xf32>
    %167 = vector.extract_strided_slice %144 {offsets = [6, 0], sizes = [1, 8], strides = [1, 1]} : vector<49x8xf32> to vector<1x8xf32>
    %168 = vector.extract_strided_slice %144 {offsets = [16, 0], sizes = [1, 8], strides = [1, 1]} : vector<49x8xf32> to vector<1x8xf32>
    %169 = vector.extract_strided_slice %144 {offsets = [18, 0], sizes = [1, 8], strides = [1, 1]} : vector<49x8xf32> to vector<1x8xf32>
    %170 = vector.extract_strided_slice %144 {offsets = [20, 0], sizes = [1, 8], strides = [1, 1]} : vector<49x8xf32> to vector<1x8xf32>
    %171 = vector.extract_strided_slice %144 {offsets = [30, 0], sizes = [1, 8], strides = [1, 1]} : vector<49x8xf32> to vector<1x8xf32>
    %172 = vector.extract_strided_slice %144 {offsets = [32, 0], sizes = [1, 8], strides = [1, 1]} : vector<49x8xf32> to vector<1x8xf32>
    %173 = vector.extract_strided_slice %144 {offsets = [34, 0], sizes = [1, 8], strides = [1, 1]} : vector<49x8xf32> to vector<1x8xf32>
    %174 = tpu.concatenate %165, %166, %167, %168, %169, %170, %171, %172, %173 in 0 : vector<1x8xf32>, vector<1x8xf32>, vector<1x8xf32>, vector<1x8xf32>, vector<1x8xf32>, vector<1x8xf32>, vector<1x8xf32>, vector<1x8xf32>, vector<1x8xf32> -> vector<9x8xf32>
    %175 = vector.extract_strided_slice %144 {offsets = [7, 0], sizes = [1, 8], strides = [1, 1]} : vector<49x8xf32> to vector<1x8xf32>
    %176 = vector.extract_strided_slice %144 {offsets = [9, 0], sizes = [1, 8], strides = [1, 1]} : vector<49x8xf32> to vector<1x8xf32>
    %177 = vector.extract_strided_slice %144 {offsets = [11, 0], sizes = [1, 8], strides = [1, 1]} : vector<49x8xf32> to vector<1x8xf32>
    %178 = vector.extract_strided_slice %144 {offsets = [21, 0], sizes = [1, 8], strides = [1, 1]} : vector<49x8xf32> to vector<1x8xf32>
    %179 = vector.extract_strided_slice %144 {offsets = [23, 0], sizes = [1, 8], strides = [1, 1]} : vector<49x8xf32> to vector<1x8xf32>
    %180 = vector.extract_strided_slice %144 {offsets = [25, 0], sizes = [1, 8], strides = [1, 1]} : vector<49x8xf32> to vector<1x8xf32>
    %181 = vector.extract_strided_slice %144 {offsets = [35, 0], sizes = [1, 8], strides = [1, 1]} : vector<49x8xf32> to vector<1x8xf32>
    %182 = vector.extract_strided_slice %144 {offsets = [37, 0], sizes = [1, 8], strides = [1, 1]} : vector<49x8xf32> to vector<1x8xf32>
    %183 = vector.extract_strided_slice %144 {offsets = [39, 0], sizes = [1, 8], strides = [1, 1]} : vector<49x8xf32> to vector<1x8xf32>
    %184 = tpu.concatenate %175, %176, %177, %178, %179, %180, %181, %182, %183 in 0 : vector<1x8xf32>, vector<1x8xf32>, vector<1x8xf32>, vector<1x8xf32>, vector<1x8xf32>, vector<1x8xf32>, vector<1x8xf32>, vector<1x8xf32>, vector<1x8xf32> -> vector<9x8xf32>
    %185 = vector.extract_strided_slice %144 {offsets = [8, 0], sizes = [1, 8], strides = [1, 1]} : vector<49x8xf32> to vector<1x8xf32>
    %186 = vector.extract_strided_slice %144 {offsets = [10, 0], sizes = [1, 8], strides = [1, 1]} : vector<49x8xf32> to vector<1x8xf32>
    %187 = vector.extract_strided_slice %144 {offsets = [12, 0], sizes = [1, 8], strides = [1, 1]} : vector<49x8xf32> to vector<1x8xf32>
    %188 = vector.extract_strided_slice %144 {offsets = [22, 0], sizes = [1, 8], strides = [1, 1]} : vector<49x8xf32> to vector<1x8xf32>
    %189 = vector.extract_strided_slice %144 {offsets = [24, 0], sizes = [1, 8], strides = [1, 1]} : vector<49x8xf32> to vector<1x8xf32>
    %190 = vector.extract_strided_slice %144 {offsets = [26, 0], sizes = [1, 8], strides = [1, 1]} : vector<49x8xf32> to vector<1x8xf32>
    %191 = vector.extract_strided_slice %144 {offsets = [36, 0], sizes = [1, 8], strides = [1, 1]} : vector<49x8xf32> to vector<1x8xf32>
    %192 = vector.extract_strided_slice %144 {offsets = [38, 0], sizes = [1, 8], strides = [1, 1]} : vector<49x8xf32> to vector<1x8xf32>
    %193 = vector.extract_strided_slice %144 {offsets = [40, 0], sizes = [1, 8], strides = [1, 1]} : vector<49x8xf32> to vector<1x8xf32>
    %194 = tpu.concatenate %185, %186, %187, %188, %189, %190, %191, %192, %193 in 0 : vector<1x8xf32>, vector<1x8xf32>, vector<1x8xf32>, vector<1x8xf32>, vector<1x8xf32>, vector<1x8xf32>, vector<1x8xf32>, vector<1x8xf32>, vector<1x8xf32> -> vector<9x8xf32>
    %195 = vector.extract_strided_slice %144 {offsets = [9, 0], sizes = [1, 8], strides = [1, 1]} : vector<49x8xf32> to vector<1x8xf32>
    %196 = vector.extract_strided_slice %144 {offsets = [11, 0], sizes = [1, 8], strides = [1, 1]} : vector<49x8xf32> to vector<1x8xf32>
    %197 = vector.extract_strided_slice %144 {offsets = [13, 0], sizes = [1, 8], strides = [1, 1]} : vector<49x8xf32> to vector<1x8xf32>
    %198 = vector.extract_strided_slice %144 {offsets = [23, 0], sizes = [1, 8], strides = [1, 1]} : vector<49x8xf32> to vector<1x8xf32>
    %199 = vector.extract_strided_slice %144 {offsets = [25, 0], sizes = [1, 8], strides = [1, 1]} : vector<49x8xf32> to vector<1x8xf32>
    %200 = vector.extract_strided_slice %144 {offsets = [27, 0], sizes = [1, 8], strides = [1, 1]} : vector<49x8xf32> to vector<1x8xf32>
    %201 = vector.extract_strided_slice %144 {offsets = [37, 0], sizes = [1, 8], strides = [1, 1]} : vector<49x8xf32> to vector<1x8xf32>
    %202 = vector.extract_strided_slice %144 {offsets = [39, 0], sizes = [1, 8], strides = [1, 1]} : vector<49x8xf32> to vector<1x8xf32>
    %203 = vector.extract_strided_slice %144 {offsets = [41, 0], sizes = [1, 8], strides = [1, 1]} : vector<49x8xf32> to vector<1x8xf32>
    %204 = tpu.concatenate %195, %196, %197, %198, %199, %200, %201, %202, %203 in 0 : vector<1x8xf32>, vector<1x8xf32>, vector<1x8xf32>, vector<1x8xf32>, vector<1x8xf32>, vector<1x8xf32>, vector<1x8xf32>, vector<1x8xf32>, vector<1x8xf32> -> vector<9x8xf32>
    %205 = vector.extract_strided_slice %144 {offsets = [14, 0], sizes = [1, 8], strides = [1, 1]} : vector<49x8xf32> to vector<1x8xf32>
    %206 = vector.extract_strided_slice %144 {offsets = [16, 0], sizes = [1, 8], strides = [1, 1]} : vector<49x8xf32> to vector<1x8xf32>
    %207 = vector.extract_strided_slice %144 {offsets = [18, 0], sizes = [1, 8], strides = [1, 1]} : vector<49x8xf32> to vector<1x8xf32>
    %208 = vector.extract_strided_slice %144 {offsets = [28, 0], sizes = [1, 8], strides = [1, 1]} : vector<49x8xf32> to vector<1x8xf32>
    %209 = vector.extract_strided_slice %144 {offsets = [30, 0], sizes = [1, 8], strides = [1, 1]} : vector<49x8xf32> to vector<1x8xf32>
    %210 = vector.extract_strided_slice %144 {offsets = [32, 0], sizes = [1, 8], strides = [1, 1]} : vector<49x8xf32> to vector<1x8xf32>
    %211 = vector.extract_strided_slice %144 {offsets = [42, 0], sizes = [1, 8], strides = [1, 1]} : vector<49x8xf32> to vector<1x8xf32>
    %212 = vector.extract_strided_slice %144 {offsets = [44, 0], sizes = [1, 8], strides = [1, 1]} : vector<49x8xf32> to vector<1x8xf32>
    %213 = vector.extract_strided_slice %144 {offsets = [46, 0], sizes = [1, 8], strides = [1, 1]} : vector<49x8xf32> to vector<1x8xf32>
    %214 = tpu.concatenate %205, %206, %207, %208, %209, %210, %211, %212, %213 in 0 : vector<1x8xf32>, vector<1x8xf32>, vector<1x8xf32>, vector<1x8xf32>, vector<1x8xf32>, vector<1x8xf32>, vector<1x8xf32>, vector<1x8xf32>, vector<1x8xf32> -> vector<9x8xf32>
    %215 = vector.extract_strided_slice %144 {offsets = [15, 0], sizes = [1, 8], strides = [1, 1]} : vector<49x8xf32> to vector<1x8xf32>
    %216 = vector.extract_strided_slice %144 {offsets = [17, 0], sizes = [1, 8], strides = [1, 1]} : vector<49x8xf32> to vector<1x8xf32>
    %217 = vector.extract_strided_slice %144 {offsets = [19, 0], sizes = [1, 8], strides = [1, 1]} : vector<49x8xf32> to vector<1x8xf32>
    %218 = vector.extract_strided_slice %144 {offsets = [29, 0], sizes = [1, 8], strides = [1, 1]} : vector<49x8xf32> to vector<1x8xf32>
    %219 = vector.extract_strided_slice %144 {offsets = [31, 0], sizes = [1, 8], strides = [1, 1]} : vector<49x8xf32> to vector<1x8xf32>
    %220 = vector.extract_strided_slice %144 {offsets = [33, 0], sizes = [1, 8], strides = [1, 1]} : vector<49x8xf32> to vector<1x8xf32>
    %221 = vector.extract_strided_slice %144 {offsets = [43, 0], sizes = [1, 8], strides = [1, 1]} : vector<49x8xf32> to vector<1x8xf32>
    %222 = vector.extract_strided_slice %144 {offsets = [45, 0], sizes = [1, 8], strides = [1, 1]} : vector<49x8xf32> to vector<1x8xf32>
    %223 = vector.extract_strided_slice %144 {offsets = [47, 0], sizes = [1, 8], strides = [1, 1]} : vector<49x8xf32> to vector<1x8xf32>
    %224 = tpu.concatenate %215, %216, %217, %218, %219, %220, %221, %222, %223 in 0 : vector<1x8xf32>, vector<1x8xf32>, vector<1x8xf32>, vector<1x8xf32>, vector<1x8xf32>, vector<1x8xf32>, vector<1x8xf32>, vector<1x8xf32>, vector<1x8xf32> -> vector<9x8xf32>
    %225 = vector.extract_strided_slice %144 {offsets = [16, 0], sizes = [1, 8], strides = [1, 1]} : vector<49x8xf32> to vector<1x8xf32>
    %226 = vector.extract_strided_slice %144 {offsets = [18, 0], sizes = [1, 8], strides = [1, 1]} : vector<49x8xf32> to vector<1x8xf32>
    %227 = vector.extract_strided_slice %144 {offsets = [20, 0], sizes = [1, 8], strides = [1, 1]} : vector<49x8xf32> to vector<1x8xf32>
    %228 = vector.extract_strided_slice %144 {offsets = [30, 0], sizes = [1, 8], strides = [1, 1]} : vector<49x8xf32> to vector<1x8xf32>
    %229 = vector.extract_strided_slice %144 {offsets = [32, 0], sizes = [1, 8], strides = [1, 1]} : vector<49x8xf32> to vector<1x8xf32>
    %230 = vector.extract_strided_slice %144 {offsets = [34, 0], sizes = [1, 8], strides = [1, 1]} : vector<49x8xf32> to vector<1x8xf32>
    %231 = vector.extract_strided_slice %144 {offsets = [44, 0], sizes = [1, 8], strides = [1, 1]} : vector<49x8xf32> to vector<1x8xf32>
    %232 = vector.extract_strided_slice %144 {offsets = [46, 0], sizes = [1, 8], strides = [1, 1]} : vector<49x8xf32> to vector<1x8xf32>
    %233 = vector.extract_strided_slice %144 {offsets = [48, 0], sizes = [1, 8], strides = [1, 1]} : vector<49x8xf32> to vector<1x8xf32>
    %234 = tpu.concatenate %225, %226, %227, %228, %229, %230, %231, %232, %233 in 0 : vector<1x8xf32>, vector<1x8xf32>, vector<1x8xf32>, vector<1x8xf32>, vector<1x8xf32>, vector<1x8xf32>, vector<1x8xf32>, vector<1x8xf32>, vector<1x8xf32> -> vector<9x8xf32>
    %235 = tpu.concatenate %154, %164, %174, %184, %194, %204, %214, %224, %234 in 1 : vector<9x8xf32>, vector<9x8xf32>, vector<9x8xf32>, vector<9x8xf32>, vector<9x8xf32>, vector<9x8xf32>, vector<9x8xf32>, vector<9x8xf32>, vector<9x8xf32> -> vector<9x72xf32>
    %c0_8 = arith.constant 0 : index
    %c0_9 = arith.constant 0 : index
    %236 = vector.load %arg4[%c0_8, %c0_9] : memref<72x16xbf16, #tpu.memory_space<vmem>>, vector<72x16xbf16>
    %237 = arith.truncf %235 : vector<9x72xf32> to vector<9x72xbf16>
    %cst_10 = arith.constant dense<0.000000e+00> : vector<9x16xf32>
    %238 = tpu.matmul %237, %236, %cst_10 {dimension_numbers = #tpu.dot_dimension_numbers<[1], [0], [0], [1], [0, 0, 1, 1], [], []>} : vector<9x72xbf16>, vector<72x16xbf16>, vector<9x16xf32> -> vector<9x16xf32>
    %c0_11 = arith.constant 0 : index
    %c0_12 = arith.constant 0 : index
    %239 = vector.load %arg5[%c0_11, %c0_12] : memref<1x16xf32, #tpu.memory_space<vmem>>, vector<1x16xf32>
    %240 = vector.broadcast %239 : vector<1x16xf32> to vector<9x16xf32>
    %241 = arith.addf %238, %240 : vector<9x16xf32>
    %cst_13 = arith.constant 0.000000e+00 : f32
    %242 = vector.broadcast %cst_13 : f32 to vector<9x16xf32>
    %243 = arith.maximumf %241, %242 : vector<9x16xf32>
    %244 = vector.extract_strided_slice %243 {offsets = [0, 0], sizes = [1, 16], strides = [1, 1]} : vector<9x16xf32> to vector<1x16xf32>
    %245 = vector.extract_strided_slice %243 {offsets = [1, 0], sizes = [1, 16], strides = [1, 1]} : vector<9x16xf32> to vector<1x16xf32>
    %246 = vector.extract_strided_slice %243 {offsets = [2, 0], sizes = [1, 16], strides = [1, 1]} : vector<9x16xf32> to vector<1x16xf32>
    %247 = vector.extract_strided_slice %243 {offsets = [3, 0], sizes = [1, 16], strides = [1, 1]} : vector<9x16xf32> to vector<1x16xf32>
    %248 = vector.extract_strided_slice %243 {offsets = [4, 0], sizes = [1, 16], strides = [1, 1]} : vector<9x16xf32> to vector<1x16xf32>
    %249 = vector.extract_strided_slice %243 {offsets = [5, 0], sizes = [1, 16], strides = [1, 1]} : vector<9x16xf32> to vector<1x16xf32>
    %250 = vector.extract_strided_slice %243 {offsets = [6, 0], sizes = [1, 16], strides = [1, 1]} : vector<9x16xf32> to vector<1x16xf32>
    %251 = vector.extract_strided_slice %243 {offsets = [7, 0], sizes = [1, 16], strides = [1, 1]} : vector<9x16xf32> to vector<1x16xf32>
    %252 = vector.extract_strided_slice %243 {offsets = [8, 0], sizes = [1, 16], strides = [1, 1]} : vector<9x16xf32> to vector<1x16xf32>
    %253 = tpu.concatenate %244, %245, %246, %247, %248, %249, %250, %251, %252 in 1 : vector<1x16xf32>, vector<1x16xf32>, vector<1x16xf32>, vector<1x16xf32>, vector<1x16xf32>, vector<1x16xf32>, vector<1x16xf32>, vector<1x16xf32>, vector<1x16xf32> -> vector<1x144xf32>
    %c0_14 = arith.constant 0 : index
    %c0_15 = arith.constant 0 : index
    %254 = vector.load %arg6[%c0_14, %c0_15] : memref<144x16xbf16, #tpu.memory_space<vmem>>, vector<144x16xbf16>
    %255 = arith.truncf %253 : vector<1x144xf32> to vector<1x144xbf16>
    %cst_16 = arith.constant dense<0.000000e+00> : vector<1x16xf32>
    %256 = tpu.matmul %255, %254, %cst_16 {dimension_numbers = #tpu.dot_dimension_numbers<[1], [0], [0], [1], [0, 0, 1, 1], [], []>} : vector<1x144xbf16>, vector<144x16xbf16>, vector<1x16xf32> -> vector<1x16xf32>
    %c0_17 = arith.constant 0 : index
    %c0_18 = arith.constant 0 : index
    %257 = vector.load %arg7[%c0_17, %c0_18] : memref<1x16xf32, #tpu.memory_space<vmem>>, vector<1x16xf32>
    %258 = arith.addf %256, %257 : vector<1x16xf32>
    %cst_19 = arith.constant 0.000000e+00 : f32
    %259 = vector.broadcast %cst_19 : f32 to vector<1x16xf32>
    %260 = arith.maximumf %258, %259 : vector<1x16xf32>
    %c0_20 = arith.constant 0 : index
    %c0_21 = arith.constant 0 : index
    %261 = vector.load %arg8[%c0_20, %c0_21] : memref<16x64xbf16, #tpu.memory_space<vmem>>, vector<16x64xbf16>
    %262 = arith.truncf %260 : vector<1x16xf32> to vector<1x16xbf16>
    %cst_22 = arith.constant dense<0.000000e+00> : vector<1x64xf32>
    %263 = tpu.matmul %262, %261, %cst_22 {dimension_numbers = #tpu.dot_dimension_numbers<[1], [0], [0], [1], [0, 0, 1, 1], [], []>} : vector<1x16xbf16>, vector<16x64xbf16>, vector<1x64xf32> -> vector<1x64xf32>
    %c0_23 = arith.constant 0 : index
    %c0_24 = arith.constant 0 : index
    %264 = vector.load %arg9[%c0_23, %c0_24] : memref<1x64xf32, #tpu.memory_space<vmem>>, vector<1x64xf32>
    %265 = arith.addf %263, %264 : vector<1x64xf32>
    %cst_25 = arith.constant 0.000000e+00 : f32
    %266 = vector.broadcast %cst_25 : f32 to vector<1x64xf32>
    %267 = arith.maximumf %265, %266 : vector<1x64xf32>
    %c0_26 = arith.constant 0 : index
    %c0_27 = arith.constant 0 : index
    %268 = vector.load %arg10[%c0_26, %c0_27] : memref<64x128xbf16, #tpu.memory_space<vmem>>, vector<64x128xbf16>
    %269 = arith.truncf %267 : vector<1x64xf32> to vector<1x64xbf16>
    %cst_28 = arith.constant dense<0.000000e+00> : vector<1x128xf32>
    %270 = tpu.matmul %269, %268, %cst_28 {dimension_numbers = #tpu.dot_dimension_numbers<[1], [0], [0], [1], [0, 0, 1, 1], [], []>} : vector<1x64xbf16>, vector<64x128xbf16>, vector<1x128xf32> -> vector<1x128xf32>
    %c0_29 = arith.constant 0 : index
    %c0_30 = arith.constant 0 : index
    %271 = vector.load %arg11[%c0_29, %c0_30] : memref<1x128xf32, #tpu.memory_space<vmem>>, vector<1x128xf32>
    %272 = arith.addf %270, %271 : vector<1x128xf32>
    %c0_31 = arith.constant 0 : index
    %c0_32 = arith.constant 0 : index
    %c0_33 = arith.constant 0 : index
    %273 = vector.load %arg12[%c0_31, %c0_32, %c0_33] : memref<1x1x128xf32, #tpu.memory_space<vmem>>, vector<1x1x128xf32>
    %274 = vector.shape_cast %273 : vector<1x1x128xf32> to vector<1x128xf32>
    %275 = vector.shape_cast %272 : vector<1x128xf32> to vector<1x1x128xf32>
    tpu.vector_store %arg12[%c0_31, %c0_32, %c0_33], %275 {strides = array<i32>} : memref<1x1x128xf32, #tpu.memory_space<vmem>>, vector<1x1x128xf32>,
    return
  }
  func.func @transform_0(%arg0: i32) -> (i32, i32, i32, i32) {
    %c0_i32 = arith.constant 0 : i32
    %c0_i32_0 = arith.constant 0 : i32
    %c0_i32_1 = arith.constant 0 : i32
    %c0_i32_2 = arith.constant 0 : i32
    return %arg0, %c0_i32, %c0_i32_0, %c0_i32_1 : i32, i32, i32, i32
  }
  func.func @transform_1(%arg0: i32) -> (i32, i32) {
    %c0_i32 = arith.constant 0 : i32
    %c0_i32_0 = arith.constant 0 : i32
    %c0_i32_1 = arith.constant 0 : i32
    return %c0_i32, %c0_i32_0 : i32, i32
  }
  func.func @transform_2(%arg0: i32) -> (i32, i32) {
    %c0_i32 = arith.constant 0 : i32
    %c0_i32_0 = arith.constant 0 : i32
    %c0_i32_1 = arith.constant 0 : i32
    return %c0_i32, %c0_i32_0 : i32, i32
  }
  func.func @transform_3(%arg0: i32) -> (i32, i32) {
    %c0_i32 = arith.constant 0 : i32
    %c0_i32_0 = arith.constant 0 : i32
    %c0_i32_1 = arith.constant 0 : i32
    return %c0_i32, %c0_i32_0 : i32, i32
  }
  func.func @transform_4(%arg0: i32) -> (i32, i32) {
    %c0_i32 = arith.constant 0 : i32
    %c0_i32_0 = arith.constant 0 : i32
    %c0_i32_1 = arith.constant 0 : i32
    return %c0_i32, %c0_i32_0 : i32, i32
  }
  func.func @transform_5(%arg0: i32) -> (i32, i32) {
    %c0_i32 = arith.constant 0 : i32
    %c0_i32_0 = arith.constant 0 : i32
    %c0_i32_1 = arith.constant 0 : i32
    return %c0_i32, %c0_i32_0 : i32, i32
  }
  func.func @transform_6(%arg0: i32) -> (i32, i32) {
    %c0_i32 = arith.constant 0 : i32
    %c0_i32_0 = arith.constant 0 : i32
    %c0_i32_1 = arith.constant 0 : i32
    return %c0_i32, %c0_i32_0 : i32, i32
  }
  func.func @transform_7(%arg0: i32) -> (i32, i32) {
    %c0_i32 = arith.constant 0 : i32
    %c0_i32_0 = arith.constant 0 : i32
    %c0_i32_1 = arith.constant 0 : i32
    return %c0_i32, %c0_i32_0 : i32, i32
  }
  func.func @transform_8(%arg0: i32) -> (i32, i32) {
    %c0_i32 = arith.constant 0 : i32
    %c0_i32_0 = arith.constant 0 : i32
    %c0_i32_1 = arith.constant 0 : i32
    return %c0_i32, %c0_i32_0 : i32, i32
  }
  func.func @transform_9(%arg0: i32) -> (i32, i32) {
    %c0_i32 = arith.constant 0 : i32
    %c0_i32_0 = arith.constant 0 : i32
    %c0_i32_1 = arith.constant 0 : i32
    return %c0_i32, %c0_i32_0 : i32, i32
  }
  func.func @transform_10(%arg0: i32) -> (i32, i32) {
    %c0_i32 = arith.constant 0 : i32
    %c0_i32_0 = arith.constant 0 : i32
    %c0_i32_1 = arith.constant 0 : i32
    return %c0_i32, %c0_i32_0 : i32, i32
  }
  func.func @transform_11(%arg0: i32) -> (i32, i32, i32) {
    %c0_i32 = arith.constant 0 : i32
    %c0_i32_0 = arith.constant 0 : i32
    %c0_i32_1 = arith.constant 0 : i32
    return %arg0, %c0_i32, %c0_i32_0 : i32, i32, i32
  }
}

</mosaic_0001>

<llo_original>
// kernel: dddqn_forward.1
$region0: #{dddqn_forward.1}
  #allocation0 [shape = 'u32[]', space=smem, size = 0x4, offset = 0x4, fixed_abs, tag = 'smem constant byte address 0x4 - core index']
  #allocation1 [shape = 'u32[144,128]{1,0:T(1,128)}', space=vmem, size = 0x12000, scoped, tag = 'internal scratch']
  %s0 = inlined_call_operand.vmem [shape: bf16[2,32,8,4], index: 0, kind: input, shape index: {}]
  %s1 = inlined_call_operand.vmem [shape: bf16[36,8], index: 1, kind: input, shape index: {}]
  %s2 = inlined_call_operand.vmem [shape: f32[1,8], index: 2, kind: input, shape index: {}]
  %s3 = inlined_call_operand.vmem [shape: bf16[72,16], index: 3, kind: input, shape index: {}]
  %s4 = inlined_call_operand.vmem [shape: f32[1,16], index: 4, kind: input, shape index: {}]
  %s5 = inlined_call_operand.vmem [shape: bf16[144,16], index: 5, kind: input, shape index: {}]
  %s6 = inlined_call_operand.vmem [shape: f32[1,16], index: 6, kind: input, shape index: {}]
  %s7 = inlined_call_operand.vmem [shape: bf16[16,64], index: 7, kind: input, shape index: {}]
  %s8 = inlined_call_operand.vmem [shape: f32[1,64], index: 8, kind: input, shape index: {}]
  %s9 = inlined_call_operand.vmem [shape: bf16[64,128], index: 9, kind: input, shape index: {}]
  %s10 = inlined_call_operand.vmem [shape: f32[1,128], index: 10, kind: input, shape index: {}]
  %s11 = inlined_call_operand.hbm [shape: f32[2,1,128], index: 11, kind: output, shape index: {}]
  %s12 = sld [smem:[#allocation0]]
  $region77: #{dddqn_forward.1} parent=0
    _
  %s14 = ssub.s32 1, %s12
  %s15 = scalar_select 0, %s14, %s12
  $region1: #{dddqn_forward.1} parent=0
    #allocation2 [shape = 'u8[1024]{0}', space=vmem, size = 0x400, scoped, tag = 'output window, operand 0']
    #allocation3 [shape = 's32[2]{0}', space=sflag, size = 0x8, scoped, tag = 'scoped memory for dddqn_forward.1']
    %16 = vsyncpa [#allocation3], 0
    %s17 = scalar_lea.sflag [#allocation3], 1
    %18 = vsyncpa %s17, 0
    loop: start=0, step=1, limit=4
    $region2: #{dddqn_forward.1} parent=1 // loop_pre_header
      _
    $region3: #{dddqn_forward.1} parent=1 // loop_header
      %s20 = sphi 0, %s24
      %p21 = scmp.ge.s32.totalorder %s20, 4
      %s30 = sphi 0, %s32
      %s33 = sphi 0, %s30
      %s34 = sphi 0, %s33
      %s50 = sphi 0, %s34
      %s54 = sphi 0, %s54
      %s56 = sphi 0, %s54
      %s57 = sphi 0, %s56
      %s71 = sphi 0, %s57
      %s75 = sphi 0, %s75
      %s77 = sphi 0, %s75
      %s78 = sphi 0, %s77
      %s92 = sphi 0, %s78
      %s96 = sphi 0, %s96
      %s98 = sphi 0, %s96
      %s99 = sphi 0, %s98
      %s113 = sphi 0, %s99
      %s117 = sphi 0, %s117
      %s119 = sphi 0, %s117
      %s120 = sphi 0, %s119
      %s134 = sphi 0, %s120
      %s138 = sphi 0, %s138
      %s140 = sphi 0, %s138
      %s141 = sphi 0, %s140
      %s155 = sphi 0, %s141
      %s159 = sphi 0, %s159
      %s161 = sphi 0, %s159
      %s162 = sphi 0, %s161
      %s176 = sphi 0, %s162
      %s180 = sphi 0, %s180
      %s182 = sphi 0, %s180
      %s183 = sphi 0, %s182
      %s197 = sphi 0, %s183
      %s201 = sphi 0, %s201
      %s203 = sphi 0, %s201
      %s204 = sphi 0, %s203
      %s218 = sphi 0, %s204
      %s222 = sphi 0, %s222
      %s224 = sphi 0, %s222
      %s225 = sphi 0, %s224
      %s239 = sphi 0, %s225
      %s243 = sphi 0, %s243
      %s245 = sphi 0, %s243
      %s246 = sphi 0, %s245
      %s260 = sphi 0, %s246
      %s266 = sphi 0, %s268
      %s269 = sphi 0, %s266
      %s270 = sphi 0, %s269
      %s286 = sphi 0, %s270
    $region4: #{dddqn_forward.1} parent=1 // loop_header_branch
      %23 = sbr.rel (%p21) target = $region8
    $region5: #{dddqn_forward.1} parent=1 // loop_body
      %s25 = ssub.s32 %s20, 1
      %s26 = ssub.s32 %s20, 2
      %s27 = sadd.s32 %s20, 1
      %s28 = ssub.s32 %s20, %s27
      %p29 = scmp.eq.s32.totalorder %s28, 0
      %s31 = sadd.s32 %s30, 1
      %s32 = scalar_select %p29, %s30, %s31
      %p35 = pneg %p29
      %p36 = scmp.eq.s32.totalorder %s20, 1
      %p37 = por %p35, %p36
      %p38 = scmp.ne.s32.totalorder %s30, %s33
      %p39 = scmp.eq.s32.totalorder %s20, 0
      %p40 = por %p38, %p39
      %p41 = scmp.ne.s32.totalorder %s30, %s33
      %p42 = scmp.eq.s32.totalorder %s25, 1
      %p43 = por %p41, %p42
      %p44 = scmp.ne.s32.totalorder %s33, %s34
      %p45 = scmp.eq.s32.totalorder %s25, 0
      %p46 = por %p44, %p45
      %p47 = scmp.ne.s32.totalorder %s33, %s34
      %p48 = scmp.eq.s32.totalorder %s26, 1
      %p49 = por %p47, %p48
      %p51 = scmp.ne.s32.totalorder %s34, %s50
      %p52 = scmp.eq.s32.totalorder %s26, 0
      %p53 = por %p51, %p52
      %s55 = sadd.s32 %s54, 1
      %p58 = scmp.eq.s32.totalorder %s20, 1
      %p59 = scmp.ne.s32.totalorder %s54, %s56
      %p60 = scmp.eq.s32.totalorder %s20, 0
      %p61 = por %p59, %p60
      %p62 = scmp.ne.s32.totalorder %s54, %s56
      %p63 = scmp.eq.s32.totalorder %s25, 1
      %p64 = por %p62, %p63
      %p65 = scmp.ne.s32.totalorder %s56, %s57
      %p66 = scmp.eq.s32.totalorder %s25, 0
      %p67 = por %p65, %p66
      %p68 = scmp.ne.s32.totalorder %s56, %s57
      %p69 = scmp.eq.s32.totalorder %s26, 1
      %p70 = por %p68, %p69
      %p72 = scmp.ne.s32.totalorder %s57, %s71
      %p73 = scmp.eq.s32.totalorder %s26, 0
      %p74 = por %p72, %p73
      %s76 = sadd.s32 %s75, 1
      %p79 = scmp.eq.s32.totalorder %s20, 1
      %p80 = scmp.ne.s32.totalorder %s75, %s77
      %p81 = scmp.eq.s32.totalorder %s20, 0
      %p82 = por %p80, %p81
      %p83 = scmp.ne.s32.totalorder %s75, %s77
      %p84 = scmp.eq.s32.totalorder %s25, 1
      %p85 = por %p83, %p84
      %p86 = scmp.ne.s32.totalorder %s77, %s78
      %p87 = scmp.eq.s32.totalorder %s25, 0
      %p88 = por %p86, %p87
      %p89 = scmp.ne.s32.totalorder %s77, %s78
      %p90 = scmp.eq.s32.totalorder %s26, 1
      %p91 = por %p89, %p90
      %p93 = scmp.ne.s32.totalorder %s78, %s92
      %p94 = scmp.eq.s32.totalorder %s26, 0
      %p95 = por %p93, %p94
      %s97 = sadd.s32 %s96, 1
      %p100 = scmp.eq.s32.totalorder %s20, 1
      %p101 = scmp.ne.s32.totalorder %s96, %s98
      %p102 = scmp.eq.s32.totalorder %s20, 0
      %p103 = por %p101, %p102
      %p104 = scmp.ne.s32.totalorder %s96, %s98
      %p105 = scmp.eq.s32.totalorder %s25, 1
      %p106 = por %p104, %p105
      %p107 = scmp.ne.s32.totalorder %s98, %s99
      %p108 = scmp.eq.s32.totalorder %s25, 0
      %p109 = por %p107, %p108
      %p110 = scmp.ne.s32.totalorder %s98, %s99
      %p111 = scmp.eq.s32.totalorder %s26, 1
      %p112 = por %p110, %p111
      %p114 = scmp.ne.s32.totalorder %s99, %s113
      %p115 = scmp.eq.s32.totalorder %s26, 0
      %p116 = por %p114, %p115
      %s118 = sadd.s32 %s117, 1
      %p121 = scmp.eq.s32.totalorder %s20, 1
      %p122 = scmp.ne.s32.totalorder %s117, %s119
      %p123 = scmp.eq.s32.totalorder %s20, 0
      %p124 = por %p122, %p123
      %p125 = scmp.ne.s32.totalorder %s117, %s119
      %p126 = scmp.eq.s32.totalorder %s25, 1
      %p127 = por %p125, %p126
      %p128 = scmp.ne.s32.totalorder %s119, %s120
      %p129 = scmp.eq.s32.totalorder %s25, 0
      %p130 = por %p128, %p129
      %p131 = scmp.ne.s32.totalorder %s119, %s120
      %p132 = scmp.eq.s32.totalorder %s26, 1
      %p133 = por %p131, %p132
      %p135 = scmp.ne.s32.totalorder %s120, %s134
      %p136 = scmp.eq.s32.totalorder %s26, 0
      %p137 = por %p135, %p136
      %s139 = sadd.s32 %s138, 1
      %p142 = scmp.eq.s32.totalorder %s20, 1
      %p143 = scmp.ne.s32.totalorder %s138, %s140
      %p144 = scmp.eq.s32.totalorder %s20, 0
      %p145 = por %p143, %p144
      %p146 = scmp.ne.s32.totalorder %s138, %s140
      %p147 = scmp.eq.s32.totalorder %s25, 1
      %p148 = por %p146, %p147
      %p149 = scmp.ne.s32.totalorder %s140, %s141
      %p150 = scmp.eq.s32.totalorder %s25, 0
      %p151 = por %p149, %p150
      %p152 = scmp.ne.s32.totalorder %s140, %s141
      %p153 = scmp.eq.s32.totalorder %s26, 1
      %p154 = por %p152, %p153
      %p156 = scmp.ne.s32.totalorder %s141, %s155
      %p157 = scmp.eq.s32.totalorder %s26, 0
      %p158 = por %p156, %p157
      %s160 = sadd.s32 %s159, 1
      %p163 = scmp.eq.s32.totalorder %s20, 1
      %p164 = scmp.ne.s32.totalorder %s159, %s161
      %p165 = scmp.eq.s32.totalorder %s20, 0
      %p166 = por %p164, %p165
      %p167 = scmp.ne.s32.totalorder %s159, %s161
      %p168 = scmp.eq.s32.totalorder %s25, 1
      %p169 = por %p167, %p168
      %p170 = scmp.ne.s32.totalorder %s161, %s162
      %p171 = scmp.eq.s32.totalorder %s25, 0
      %p172 = por %p170, %p171
      %p173 = scmp.ne.s32.totalorder %s161, %s162
      %p174 = scmp.eq.s32.totalorder %s26, 1
      %p175 = por %p173, %p174
      %p177 = scmp.ne.s32.totalorder %s162, %s176
      %p178 = scmp.eq.s32.totalorder %s26, 0
      %p179 = por %p177, %p178
      %s181 = sadd.s32 %s180, 1
      %p184 = scmp.eq.s32.totalorder %s20, 1
      %p185 = scmp.ne.s32.totalorder %s180, %s182
      %p186 = scmp.eq.s32.totalorder %s20, 0
      %p187 = por %p185, %p186
      %p188 = scmp.ne.s32.totalorder %s180, %s182
      %p189 = scmp.eq.s32.totalorder %s25, 1
      %p190 = por %p188, %p189
      %p191 = scmp.ne.s32.totalorder %s182, %s183
      %p192 = scmp.eq.s32.totalorder %s25, 0
      %p193 = por %p191, %p192
      %p194 = scmp.ne.s32.totalorder %s182, %s183
      %p195 = scmp.eq.s32.totalorder %s26, 1
      %p196 = por %p194, %p195
      %p198 = scmp.ne.s32.totalorder %s183, %s197
      %p199 = scmp.eq.s32.totalorder %s26, 0
      %p200 = por %p198, %p199
      %s202 = sadd.s32 %s201, 1
      %p205 = scmp.eq.s32.totalorder %s20, 1
      %p206 = scmp.ne.s32.totalorder %s201, %s203
      %p207 = scmp.eq.s32.totalorder %s20, 0
      %p208 = por %p206, %p207
      %p209 = scmp.ne.s32.totalorder %s201, %s203
      %p210 = scmp.eq.s32.totalorder %s25, 1
      %p211 = por %p209, %p210
      %p212 = scmp.ne.s32.totalorder %s203, %s204
      %p213 = scmp.eq.s32.totalorder %s25, 0
      %p214 = por %p212, %p213
      %p215 = scmp.ne.s32.totalorder %s203, %s204
      %p216 = scmp.eq.s32.totalorder %s26, 1
      %p217 = por %p215, %p216
      %p219 = scmp.ne.s32.totalorder %s204, %s218
      %p220 = scmp.eq.s32.totalorder %s26, 0
      %p221 = por %p219, %p220
      %s223 = sadd.s32 %s222, 1
      %p226 = scmp.eq.s32.totalorder %s20, 1
      %p227 = scmp.ne.s32.totalorder %s222, %s224
      %p228 = scmp.eq.s32.totalorder %s20, 0
      %p229 = por %p227, %p228
      %p230 = scmp.ne.s32.totalorder %s222, %s224
      %p231 = scmp.eq.s32.totalorder %s25, 1
      %p232 = por %p230, %p231
      %p233 = scmp.ne.s32.totalorder %s224, %s225
      %p234 = scmp.eq.s32.totalorder %s25, 0
      %p235 = por %p233, %p234
      %p236 = scmp.ne.s32.totalorder %s224, %s225
      %p237 = scmp.eq.s32.totalorder %s26, 1
      %p238 = por %p236, %p237
      %p240 = scmp.ne.s32.totalorder %s225, %s239
      %p241 = scmp.eq.s32.totalorder %s26, 0
      %p242 = por %p240, %p241
      %s244 = sadd.s32 %s243, 1
      %p247 = scmp.eq.s32.totalorder %s20, 1
      %p248 = scmp.ne.s32.totalorder %s243, %s245
      %p249 = scmp.eq.s32.totalorder %s20, 0
      %p250 = por %p248, %p249
      %p251 = scmp.ne.s32.totalorder %s243, %s245
      %p252 = scmp.eq.s32.totalorder %s25, 1
      %p253 = por %p251, %p252
      %p254 = scmp.ne.s32.totalorder %s245, %s246
      %p255 = scmp.eq.s32.totalorder %s25, 0
      %p256 = por %p254, %p255
      %p257 = scmp.ne.s32.totalorder %s245, %s246
      %p258 = scmp.eq.s32.totalorder %s26, 1
      %p259 = por %p257, %p258
      %p261 = scmp.ne.s32.totalorder %s246, %s260
      %p262 = scmp.eq.s32.totalorder %s26, 0
      %p263 = por %p261, %p262
      %s264 = ssub.s32 %s20, %s27
      %p265 = scmp.eq.s32.totalorder %s264, 0
      %s267 = sadd.s32 %s266, 1
      %s268 = scalar_select %p265, %s266, %s267
      %p271 = pneg %p265
      %p272 = scmp.eq.s32.totalorder %s20, 1
      %p273 = por %p271, %p272
      %p274 = scmp.ne.s32.totalorder %s266, %s269
      %p275 = scmp.eq.s32.totalorder %s20, 0
      %p276 = por %p274, %p275
      %p277 = scmp.ne.s32.totalorder %s266, %s269
      %p278 = scmp.eq.s32.totalorder %s25, 1
      %p279 = por %p277, %p278
      %p280 = scmp.ne.s32.totalorder %s269, %s270
      %p281 = scmp.eq.s32.totalorder %s25, 0
      %p282 = por %p280, %p281
      %p283 = scmp.ne.s32.totalorder %s269, %s270
      %p284 = scmp.eq.s32.totalorder %s26, 1
      %p285 = por %p283, %p284
      %p287 = scmp.ne.s32.totalorder %s270, %s286
      %p288 = scmp.eq.s32.totalorder %s26, 0
      %p289 = por %p287, %p288
      %p290 = scmp.le.s32.totalorder 1, %s20
      %p291 = scmp.lt.s32.totalorder %s20, 3
      %p292 = pnand %p290, %p291
      %p293 = pneg %p292
      // Predicated region
      $region9: #{dddqn_forward.1} parent=5 // pred_check
        _
      $region10: #{dddqn_forward.1} parent=5 // pred_check_branch
        %295 = sbr.rel (%p292) target = $region12
      $region11: #{dddqn_forward.1} parent=5 // pred_region
        %s296 = ssub.s32 %s20, 1
        // Predicated region
        $region13: #{dddqn_forward.1} parent=11 // pred_check
          %p297 = pneg %p67
        $region14: #{dddqn_forward.1} parent=11 // pred_check_branch
          %299 = sbr.rel (%p297) target = $region16
        $region15: #{dddqn_forward.1} parent=11 // pred_region
          _
        $region16: #{dddqn_forward.1} parent=11 // pred_fallthru
          _
        // Predicated region
        $region17: #{dddqn_forward.1} parent=11 // pred_check
          %p300 = pneg %p88
        $region18: #{dddqn_forward.1} parent=11 // pred_check_branch
          %302 = sbr.rel (%p300) target = $region20
        $region19: #{dddqn_forward.1} parent=11 // pred_region
          _
        $region20: #{dddqn_forward.1} parent=11 // pred_fallthru
          _
        // Predicated region
        $region21: #{dddqn_forward.1} parent=11 // pred_check
          %p303 = pneg %p109
        $region22: #{dddqn_forward.1} parent=11 // pred_check_branch
          %305 = sbr.rel (%p303) target = $region24
        $region23: #{dddqn_forward.1} parent=11 // pred_region
          _
        $region24: #{dddqn_forward.1} parent=11 // pred_fallthru
          _
        // Predicated region
        $region25: #{dddqn_forward.1} parent=11 // pred_check
          %p306 = pneg %p130
        $region26: #{dddqn_forward.1} parent=11 // pred_check_branch
          %308 = sbr.rel (%p306) target = $region28
        $region27: #{dddqn_forward.1} parent=11 // pred_region
          _
        $region28: #{dddqn_forward.1} parent=11 // pred_fallthru
          _
        // Predicated region
        $region29: #{dddqn_forward.1} parent=11 // pred_check
          %p309 = pneg %p151
        $region30: #{dddqn_forward.1} parent=11 // pred_check_branch
          %311 = sbr.rel (%p309) target = $region32
        $region31: #{dddqn_forward.1} parent=11 // pred_region
          _
        $region32: #{dddqn_forward.1} parent=11 // pred_fallthru
          _
        // Predicated region
        $region33: #{dddqn_forward.1} parent=11 // pred_check
          %p312 = pneg %p172
        $region34: #{dddqn_forward.1} parent=11 // pred_check_branch
          %314 = sbr.rel (%p312) target = $region36
        $region35: #{dddqn_forward.1} parent=11 // pred_region
          _
        $region36: #{dddqn_forward.1} parent=11 // pred_fallthru
          _
        // Predicated region
        $region37: #{dddqn_forward.1} parent=11 // pred_check
          %p315 = pneg %p193
        $region38: #{dddqn_forward.1} parent=11 // pred_check_branch
          %317 = sbr.rel (%p315) target = $region40
        $region39: #{dddqn_forward.1} parent=11 // pred_region
          _
        $region40: #{dddqn_forward.1} parent=11 // pred_fallthru
          _
        // Predicated region
        $region41: #{dddqn_forward.1} parent=11 // pred_check
          %p318 = pneg %p214
        $region42: #{dddqn_forward.1} parent=11 // pred_check_branch
          %320 = sbr.rel (%p318) target = $region44
        $region43: #{dddqn_forward.1} parent=11 // pred_region
          _
        $region44: #{dddqn_forward.1} parent=11 // pred_fallthru
          _
        // Predicated region
        $region45: #{dddqn_forward.1} parent=11 // pred_check
          %p321 = pneg %p235
        $region46: #{dddqn_forward.1} parent=11 // pred_check_branch
          %323 = sbr.rel (%p321) target = $region48
        $region47: #{dddqn_forward.1} parent=11 // pred_region
          _
        $region48: #{dddqn_forward.1} parent=11 // pred_fallthru
          _
        // Predicated region
        $region49: #{dddqn_forward.1} parent=11 // pred_check
          %p324 = pneg %p256
        $region50: #{dddqn_forward.1} parent=11 // pred_check_branch
          %326 = sbr.rel (%p324) target = $region52
        $region51: #{dddqn_forward.1} parent=11 // pred_region
          _
        $region52: #{dddqn_forward.1} parent=11 // pred_fallthru
          _
      $region12: #{dddqn_forward.1} parent=5 // pred_fallthru
        _
      %p327 = scmp.lt.s32.totalorder %s20, 2
      // Predicated region
      $region53: #{dddqn_forward.1} parent=5 // pred_check
        %p328 = pneg %p327
      $region54: #{dddqn_forward.1} parent=5 // pred_check_branch
        %330 = sbr.rel (%p328) target = $region56
      $region55: #{dddqn_forward.1} parent=5 // pred_region
        // Predicated region
        $region57: #{dddqn_forward.1} parent=55 // pred_check
          %p331 = pneg %p40
        $region58: #{dddqn_forward.1} parent=55 // pred_check_branch
          %333 = sbr.rel (%p331) target = $region60
        $region59: #{dddqn_forward.1} parent=55 // pred_region
          %p334 = scmp.lt.s32.totalorder %s20, 1
          %s335 = scalar_select %p334, %s20, 1
          %s336 = smul.addr %s335, 32
          %s337 = smul.addr %s336, 4
          %s338 = scalar_lea.vmem %s0, %s337
        $region60: #{dddqn_forward.1} parent=55 // pred_fallthru
          _
      $region56: #{dddqn_forward.1} parent=5 // pred_fallthru
        _
      %p339 = scmp.le.s32.totalorder 1, %s20
      %p340 = scmp.lt.s32.totalorder %s20, 3
      %p341 = pnand %p339, %p340
      %p342 = pneg %p341
      // Predicated region
      $region61: #{dddqn_forward.1} parent=5 // pred_check
        _
      $region62: #{dddqn_forward.1} parent=5 // pred_check_branch
        %344 = sbr.rel (%p341) target = $region64
      $region63: #{dddqn_forward.1} parent=5 // pred_region
        %s345 = ssub.s32 %s20, 1
        %p346 = scmp.lt.s32.totalorder %s25, 1
        %s347 = scalar_select %p346, %s25, 1
        %s348 = smul.addr %s347, 32
        %s349 = smul.addr %s348, 4
        %s350 = scalar_lea.vmem %s0, %s349
        %p351 = pneg %p46
        %p352 = pneg %p43
        %p353 = pneg %p67
        %p354 = pneg %p64
        %p355 = pneg %p88
        %p356 = pneg %p85
        %p357 = pneg %p109
        %p358 = pneg %p106
        %p359 = pneg %p130
        %p360 = pneg %p127
        %p361 = pneg %p151
        %p362 = pneg %p148
        %p363 = pneg %p172
        %p364 = pneg %p169
        %p365 = pneg %p193
        %p366 = pneg %p190
        %p367 = pneg %p214
        %p368 = pneg %p211
        %p369 = pneg %p235
        %p370 = pneg %p232
        %p371 = pneg %p256
        %p372 = pneg %p253
        %p373 = pneg %p282
        %p374 = pneg %p279
        %s375 = sand.u32 %s269, 1
        %s376 = scalar_lea.sflag [#allocation3], %s375
        %s377 = sand.u32 %s269, 1
        %s378 = scalar_lea.vmem [#allocation2], %s377
        %p379 = scmp.lt.s32.totalorder %s25, 1
        %s380 = scalar_select %p379, %s25, 1
        %s381 = smul.addr %s380, 32
        %s382 = smul.addr %s381, 4
        %s383 = scalar_lea.vmem %s0, %s382
        %v385 = vld [vmem:[%s383] sm:$0xf]
        %v386 = vld [vmem:[%s383 + $0x4] sm:$0xf]
        %v387 = vld [vmem:[%s383 + $0x8] sm:$0xf]
        %v388 = vld [vmem:[%s383 + $0xc] sm:$0xf]
        %v389 = vld [vmem:[%s383 + $0x10] sm:$0xf]
        %v390 = vld [vmem:[%s383 + $0x14] sm:$0xf]
        %v391 = vld [vmem:[%s383 + $0x18] sm:$0xf]
        %v392 = vld [vmem:[%s383 + $0x1c] sm:$0xf]
        %v393 = vld [vmem:[%s383 + $0x20] sm:$0xf]
        %v394 = vld [vmem:[%s383 + $0x24] sm:$0xf]
        %v395 = vld [vmem:[%s383 + $0x28] sm:$0xf]
        %v396 = vld [vmem:[%s383 + $0x2c] sm:$0xf]
        %v397 = vld [vmem:[%s383 + $0x30] sm:$0xf]
        %v398 = vld [vmem:[%s383 + $0x34] sm:$0xf]
        %v399 = vld [vmem:[%s383 + $0x38] sm:$0xf]
        %v400 = vld [vmem:[%s383 + $0x3c] sm:$0xf]
        %v401 = vld [vmem:[%s383 + $0x40] sm:$0xf]
        %v402 = vld [vmem:[%s383 + $0x44] sm:$0xf]
        %v403 = vld [vmem:[%s383 + $0x48] sm:$0xf]
        %v404 = vld [vmem:[%s383 + $0x4c] sm:$0xf]
        %v405 = vld [vmem:[%s383 + $0x50] sm:$0xf]
        %v406 = vld [vmem:[%s383 + $0x54] sm:$0xf]
        %v407 = vld [vmem:[%s383 + $0x58] sm:$0xf]
        %v408 = vld [vmem:[%s383 + $0x5c] sm:$0xf]
        %v409 = vld [vmem:[%s383 + $0x60] sm:$0xf]
        %v410 = vld [vmem:[%s383 + $0x64] sm:$0xf]
        %v411 = vld [vmem:[%s383 + $0x68] sm:$0xf]
        %v412 = vld [vmem:[%s383 + $0x6c] sm:$0xf]
        %v413 = vld [vmem:[%s383 + $0x70] sm:$0xf]
        %v414 = vld [vmem:[%s383 + $0x74] sm:$0xf]
        %v415 = vunpack.c.l.bf16 %v385
        %v416 = vunpack.c.l.bf16 %v386
        %v417 = vunpack.c.l.bf16 %v387
        %v418 = vunpack.c.l.bf16 %v388
        %v419 = vunpack.c.l.bf16 %v389
        %v420 = vunpack.c.l.bf16 %v390
        %v421 = vunpack.c.l.bf16 %v391
        %v422 = vunpack.c.l.bf16 %v392
        %v423 = vunpack.c.l.bf16 %v393
        %v424 = vunpack.c.l.bf16 %v394
        %v425 = vunpack.c.l.bf16 %v395
        %v426 = vunpack.c.l.bf16 %v396
        %v427 = vunpack.c.l.bf16 %v397
        %v428 = vunpack.c.l.bf16 %v398
        %v429 = vunpack.c.l.bf16 %v399
        %v430 = vunpack.c.l.bf16 %v400
        %v431 = vunpack.c.l.bf16 %v401
        %v432 = vunpack.c.l.bf16 %v402
        %v433 = vunpack.c.l.bf16 %v403
        %v434 = vunpack.c.l.bf16 %v404
        %v435 = vunpack.c.l.bf16 %v405
        %v436 = vunpack.c.l.bf16 %v406
        %v437 = vunpack.c.l.bf16 %v407
        %v438 = vunpack.c.l.bf16 %v408
        %v439 = vunpack.c.l.bf16 %v409
        %v440 = vunpack.c.l.bf16 %v410
        %v441 = vunpack.c.l.bf16 %v411
        %v442 = vunpack.c.l.bf16 %v412
        %v443 = vunpack.c.l.bf16 %v413
        %v444 = vunpack.c.l.bf16 %v414
        %446 = vrot.lane.b32.xlu0 %v416, 4
        %v447 = vpop.permute.xlu0 %446
        %v450 = vrot.slane %v415, 1
        %451 = vrot.lane.b32.xlu0 %v450, 8
        %v452 = vpop.permute.xlu0 %451
        %455 = vrot.lane.b32.xlu0 %v417, 12
        %v456 = vpop.permute.xlu0 %455
        %459 = vrot.lane.b32.xlu0 %v418, 16
        %v460 = vpop.permute.xlu0 %459
        %v462 = vrot.slane %v417, 1
        %463 = vrot.lane.b32.xlu0 %v462, 20
        %v464 = vpop.permute.xlu0 %463
        %467 = vrot.lane.b32.xlu0 %v419, 24
        %v468 = vpop.permute.xlu0 %467
        %471 = vrot.lane.b32.xlu0 %v420, 28
        %v472 = vpop.permute.xlu0 %471
        %v474 = vrot.slane %v419, 1
        %475 = vrot.lane.b32.xlu0 %v474, 32
        %v476 = vpop.permute.xlu0 %475
        %vm478 = vcmask 31744
        %v479 = vsel %vm478, %v415, %v447
        %vm480 = vcmask 64512
        %v481 = vsel %vm480, %v479, %v452
        %vm482 = vcmask 97280
        %v483 = vsel %vm482, %v481, %v456
        %vm484 = vcmask 130048
        %v485 = vsel %vm484, %v483, %v460
        %vm486 = vcmask 162816
        %v487 = vsel %vm486, %v485, %v464
        %vm488 = vcmask 195584
        %v489 = vsel %vm488, %v487, %v468
        %vm490 = vcmask 228352
        %v491 = vsel %vm490, %v489, %v472
        %vm492 = vcmask 261120
        %v493 = vsel %vm492, %v491, %v476
        %494 = vrot.lane.b32.xlu0 %v420, 4
        %v495 = vpop.permute.xlu0 %494
        %497 = vrot.lane.b32.xlu0 %v474, 8
        %v498 = vpop.permute.xlu0 %497
        %501 = vrot.lane.b32.xlu0 %v421, 12
        %v502 = vpop.permute.xlu0 %501
        %505 = vrot.lane.b32.xlu0 %v422, 16
        %v506 = vpop.permute.xlu0 %505
        %v508 = vrot.slane %v421, 1
        %509 = vrot.lane.b32.xlu0 %v508, 20
        %v510 = vpop.permute.xlu0 %509
        %513 = vrot.lane.b32.xlu0 %v423, 24
        %v514 = vpop.permute.xlu0 %513
        %517 = vrot.lane.b32.xlu0 %v424, 28
        %v518 = vpop.permute.xlu0 %517
        %v520 = vrot.slane %v423, 1
        %521 = vrot.lane.b32.xlu0 %v520, 32
        %v522 = vpop.permute.xlu0 %521
        %v524 = vsel %vm478, %v419, %v495
        %v525 = vsel %vm480, %v524, %v498
        %v526 = vsel %vm482, %v525, %v502
        %v527 = vsel %vm484, %v526, %v506
        %v528 = vsel %vm486, %v527, %v510
        %v529 = vsel %vm488, %v528, %v514
        %v530 = vsel %vm490, %v529, %v518
        %v531 = vsel %vm492, %v530, %v522
        %532 = vrot.lane.b32.xlu0 %v424, 4
        %v533 = vpop.permute.xlu0 %532
        %535 = vrot.lane.b32.xlu0 %v520, 8
        %v536 = vpop.permute.xlu0 %535
        %539 = vrot.lane.b32.xlu0 %v425, 12
        %v540 = vpop.permute.xlu0 %539
        %543 = vrot.lane.b32.xlu0 %v426, 16
        %v544 = vpop.permute.xlu0 %543
        %v546 = vrot.slane %v425, 1
        %547 = vrot.lane.b32.xlu0 %v546, 20
        %v548 = vpop.permute.xlu0 %547
        %551 = vrot.lane.b32.xlu0 %v427, 24
        %v552 = vpop.permute.xlu0 %551
        %555 = vrot.lane.b32.xlu0 %v428, 28
        %v556 = vpop.permute.xlu0 %555
        %v558 = vrot.slane %v427, 1
        %559 = vrot.lane.b32.xlu0 %v558, 32
        %v560 = vpop.permute.xlu0 %559
        %v562 = vsel %vm478, %v423, %v533
        %v563 = vsel %vm480, %v562, %v536
        %v564 = vsel %vm482, %v563, %v540
        %v565 = vsel %vm484, %v564, %v544
        %v566 = vsel %vm486, %v565, %v548
        %v567 = vsel %vm488, %v566, %v552
        %v568 = vsel %vm490, %v567, %v556
        %v569 = vsel %vm492, %v568, %v560
        %570 = vrot.lane.b32.xlu0 %v428, 4
        %v571 = vpop.permute.xlu0 %570
        %573 = vrot.lane.b32.xlu0 %v558, 8
        %v574 = vpop.permute.xlu0 %573
        %577 = vrot.lane.b32.xlu0 %v429, 12
        %v578 = vpop.permute.xlu0 %577
        %581 = vrot.lane.b32.xlu0 %v430, 16
        %v582 = vpop.permute.xlu0 %581
        %v584 = vrot.slane %v429, 1
        %585 = vrot.lane.b32.xlu0 %v584, 20
        %v586 = vpop.permute.xlu0 %585
        %589 = vrot.lane.b32.xlu0 %v431, 24
        %v590 = vpop.permute.xlu0 %589
        %593 = vrot.lane.b32.xlu0 %v432, 28
        %v594 = vpop.permute.xlu0 %593
        %v596 = vrot.slane %v431, 1
        %597 = vrot.lane.b32.xlu0 %v596, 32
        %v598 = vpop.permute.xlu0 %597
        %v600 = vsel %vm478, %v427, %v571
        %v601 = vsel %vm480, %v600, %v574
        %v602 = vsel %vm482, %v601, %v578
        %v603 = vsel %vm484, %v602, %v582
        %v604 = vsel %vm486, %v603, %v586
        %v605 = vsel %vm488, %v604, %v590
        %v606 = vsel %vm490, %v605, %v594
        %v607 = vsel %vm492, %v606, %v598
        %608 = vrot.lane.b32.xlu0 %v432, 4
        %v609 = vpop.permute.xlu0 %608
        %611 = vrot.lane.b32.xlu0 %v596, 8
        %v612 = vpop.permute.xlu0 %611
        %615 = vrot.lane.b32.xlu0 %v433, 12
        %v616 = vpop.permute.xlu0 %615
        %619 = vrot.lane.b32.xlu0 %v434, 16
        %v620 = vpop.permute.xlu0 %619
        %v622 = vrot.slane %v433, 1
        %623 = vrot.lane.b32.xlu0 %v622, 20
        %v624 = vpop.permute.xlu0 %623
        %627 = vrot.lane.b32.xlu0 %v435, 24
        %v628 = vpop.permute.xlu0 %627
        %631 = vrot.lane.b32.xlu0 %v436, 28
        %v632 = vpop.permute.xlu0 %631
        %v634 = vrot.slane %v435, 1
        %635 = vrot.lane.b32.xlu0 %v634, 32
        %v636 = vpop.permute.xlu0 %635
        %v638 = vsel %vm478, %v431, %v609
        %v639 = vsel %vm480, %v638, %v612
        %v640 = vsel %vm482, %v639, %v616
        %v641 = vsel %vm484, %v640, %v620
        %v642 = vsel %vm486, %v641, %v624
        %v643 = vsel %vm488, %v642, %v628
        %v644 = vsel %vm490, %v643, %v632
        %v645 = vsel %vm492, %v644, %v636
        %646 = vrot.lane.b32.xlu0 %v436, 4
        %v647 = vpop.permute.xlu0 %646
        %649 = vrot.lane.b32.xlu0 %v634, 8
        %v650 = vpop.permute.xlu0 %649
        %653 = vrot.lane.b32.xlu0 %v437, 12
        %v654 = vpop.permute.xlu0 %653
        %657 = vrot.lane.b32.xlu0 %v438, 16
        %v658 = vpop.permute.xlu0 %657
        %v660 = vrot.slane %v437, 1
        %661 = vrot.lane.b32.xlu0 %v660, 20
        %v662 = vpop.permute.xlu0 %661
        %665 = vrot.lane.b32.xlu0 %v439, 24
        %v666 = vpop.permute.xlu0 %665
        %669 = vrot.lane.b32.xlu0 %v440, 28
        %v670 = vpop.permute.xlu0 %669
        %v672 = vrot.slane %v439, 1
        %673 = vrot.lane.b32.xlu0 %v672, 32
        %v674 = vpop.permute.xlu0 %673
        %v676 = vsel %vm478, %v435, %v647
        %v677 = vsel %vm480, %v676, %v650
        %v678 = vsel %vm482, %v677, %v654
        %v679 = vsel %vm484, %v678, %v658
        %v680 = vsel %vm486, %v679, %v662
        %v681 = vsel %vm488, %v680, %v666
        %v682 = vsel %vm490, %v681, %v670
        %v683 = vsel %vm492, %v682, %v674
        %684 = vrot.lane.b32.xlu0 %v440, 4
        %v685 = vpop.permute.xlu0 %684
        %687 = vrot.lane.b32.xlu0 %v672, 8
        %v688 = vpop.permute.xlu0 %687
        %691 = vrot.lane.b32.xlu0 %v441, 12
        %v692 = vpop.permute.xlu0 %691
        %695 = vrot.lane.b32.xlu0 %v442, 16
        %v696 = vpop.permute.xlu0 %695
        %v698 = vrot.slane %v441, 1
        %699 = vrot.lane.b32.xlu0 %v698, 20
        %v700 = vpop.permute.xlu0 %699
        %703 = vrot.lane.b32.xlu0 %v443, 24
        %v704 = vpop.permute.xlu0 %703
        %707 = vrot.lane.b32.xlu0 %v444, 28
        %v708 = vpop.permute.xlu0 %707
        %v710 = vrot.slane %v443, 1
        %711 = vrot.lane.b32.xlu0 %v710, 32
        %v712 = vpop.permute.xlu0 %711
        %v714 = vsel %vm478, %v439, %v685
        %v715 = vsel %vm480, %v714, %v688
        %v716 = vsel %vm482, %v715, %v692
        %v717 = vsel %vm484, %v716, %v696
        %v718 = vsel %vm486, %v717, %v700
        %v719 = vsel %vm488, %v718, %v704
        %v720 = vsel %vm490, %v719, %v708
        %v721 = vsel %vm492, %v720, %v712
        %v723 = vrot.slane %v531, 1
        %v726 = vrot.slane %v569, 2
        %v729 = vrot.slane %v607, 3
        %v732 = vrot.slane %v645, 4
        %v735 = vrot.slane %v683, 5
        %v738 = vrot.slane %v721, 6
        %vm740 = vcmask 1046528
        %v741 = vsel %vm740, %v493, %v723
        %vm742 = vcmask 1045504
        %v743 = vsel %vm742, %v723, %v726
        %vm744 = vcmask 1044480
        %v745 = vsel %vm744, %v726, %v729
        %vm746 = vcmask 1043456
        %v747 = vsel %vm746, %v729, %v732
        %vm748 = vcmask 1042432
        %v749 = vsel %vm748, %v732, %v735
        %vm750 = vcmask 1041408
        %v751 = vsel %vm750, %v735, %v738
        %v752 = vld [vmem:[%s1] sm:$0xf]
        %v753 = vld [vmem:[%s1 + $0x4] sm:$0xf]
        %v754 = vld [vmem:[%s1 + $0x8] sm:$0xf]
        %v755 = vld [vmem:[%s1 + $0xc] sm:$0xf]
        %v756 = vld [vmem:[%s1 + $0x10] sm:$0x3]
        %v757 = vpack.c.bf16 %v743, %v741
        %v758 = vpack.c.bf16 %v747, %v745
        %v759 = vpack.c.bf16 %v751, %v749
        %v760 = vpack.c.bf16 %v738, %v738
        %v761 = vld [vmem:[%s2] sm:$0x1]
        %v763 = vlaneseq
        %v764 = vshrl.u32 %v763, 7
        %v765 = vsub.s32 0, %v764
        %v766 = vrot.slane %v761, %v765
        %v773 = vunpack.c.l.b16 %v752
        %v774 = vunpack.c.l.b16 %v753
        %v775 = vunpack.c.l.b16 %v754
        %v776 = vunpack.c.l.b16 %v755
        %v777 = vunpack.c.l.b16 %v756
        %v778 = vpack.c.b16 %v774, %v773
        %v779 = vpack.c.b16 %v776, %v775
        %v780 = vpack.c.b16 %v777, %v777
        %vm783 = vcmask 293888
        %v785 = vsel %vm783, %v757, 0
        %v788 = vsel %vm783, %v758, 0
        %v791 = vsel %vm783, %v759, 0
        %v794 = vsel %vm783, %v760, 0
        %v797 = vsel %vm750, %v780, 0
        %799 = vmatprep.subr.bf16.mxu0 0
        %800 = vmatpush1.bf16.msra.mxu0 0
        %801 = vmatprep.subr.bf16.mxu0 0
        %802 = vmatpush1.bf16.msra.mxu0 0
        %803 = vmatprep.subr.bf16.mxu0 0
        %804 = vmatpush1.bf16.msra.mxu0 0
        %805 = vmatprep.subr.bf16.mxu0 0
        %806 = vmatpush1.bf16.msra.mxu0 0
        %807 = vmatprep.subr.bf16.mxu0 0
        %808 = vmatpush1.bf16.msra.mxu0 0
        %809 = vmatprep.subr.bf16.mxu0 0
        %810 = vmatpush1.bf16.msra.mxu0 %v797
        %811 = vmatprep.subr.bf16.mxu0 0
        %812 = vmatpush1.bf16.msra.mxu0 %v779
        %813 = vmatprep.subr.bf16.mxu0 0
        %814 = vmatpush1.bf16.msra.mxu0 %v778
        %815 = vmatprep.subr.bf16.mxu0 0
        %816 = vmatpush2.bf16.msra.mxu0 0
        %817 = vmatprep.subr.bf16.mxu0 0
        %818 = vmatpush2.bf16.msra.mxu0 0
        %819 = vmatprep.subr.bf16.mxu0 0
        %820 = vmatpush2.bf16.msra.mxu0 0
        %821 = vmatprep.subr.bf16.mxu0 0
        %822 = vmatpush2.bf16.msra.mxu0 0
        %823 = vmatprep.subr.bf16.mxu0 0
        %824 = vmatpush2.bf16.msra.mxu0 0
        %825 = vmatprep.subr.bf16.mxu0 0
        %826 = vmatpush2.bf16.msra.mxu0 0
        %827 = vmatprep.subr.bf16.mxu0 0
        %828 = vmatpush2.bf16.msra.mxu0 0
        %829 = vmatprep.subr.bf16.mxu0 0
        %830 = vmatpush2.bf16.msra.mxu0 0
        %831 = vmatprep.mubr.bf16.mxu0 0
        %832 = vmatmul.mubr.bf16.gmra.mxu0 %v785
        %v833 = vpop.f32.mrf.mxu0
        %v834 = vadd.f32 %v766, %v833
        %v835 = vpop.f32.mrf.mxu0
        %v836 = vpop.f32.mrf.mxu0
        %v837 = vadd.f32 %v766, %v836
        %v838 = vpop.f32.mrf.mxu0
        %839 = vmatprep.mubr.bf16.mxu0 0
        %840 = vmatmul.mubr.bf16.gmra.mxu0 %v788
        %v841 = vpop.f32.mrf.mxu0
        %v842 = vadd.f32 %v766, %v841
        %v843 = vpop.f32.mrf.mxu0
        %v844 = vpop.f32.mrf.mxu0
        %v845 = vadd.f32 %v766, %v844
        %v846 = vpop.f32.mrf.mxu0
        %847 = vmatprep.mubr.bf16.mxu0 0
        %848 = vmatmul.mubr.bf16.gmra.mxu0 %v791
        %v849 = vpop.f32.mrf.mxu0
        %v850 = vadd.f32 %v766, %v849
        %v851 = vpop.f32.mrf.mxu0
        %v852 = vpop.f32.mrf.mxu0
        %v853 = vadd.f32 %v766, %v852
        %v854 = vpop.f32.mrf.mxu0
        %855 = vmatprep.mubr.bf16.mxu0 0
        %856 = vmatmul.mubr.bf16.gmra.mxu0 %v794
        %v857 = vpop.f32.mrf.mxu0
        %v858 = vadd.f32 %v766, %v857
        %v859 = vpop.f32.mrf.mxu0
        %v860 = vpop.f32.mrf.mxu0
        %v861 = vpop.f32.mrf.mxu0
        %862 = vdwg.mxu0
        %v863 = vmax.f32 %v834, 0.0
        %v864 = vmax.f32 %v837, 0.0
        %v865 = vmax.f32 %v842, 0.0
        %v866 = vmax.f32 %v845, 0.0
        %v867 = vmax.f32 %v850, 0.0
        %v868 = vmax.f32 %v853, 0.0
        %v869 = vmax.f32 %v858, 0.0
        %v871 = vrot.slane %v863, 1
        %v873 = vrot.slane %v863, 2
        %v876 = vrot.slane %v864, 3
        %v879 = vrot.slane %v865, 4
        %v881 = vrot.slane %v865, 5
        %v884 = vrot.slane %v866, 6
        %v886 = vrot.slane %v866, 7
        %vm888 = vcmask 1040384
        %v889 = vsel %vm888, %v863, %v871
        %v890 = vsel %vm750, %v889, %v873
        %v891 = vsel %vm748, %v890, %v876
        %v892 = vsel %vm746, %v891, %v879
        %v893 = vsel %vm744, %v892, %v881
        %v894 = vsel %vm742, %v893, %v884
        %v895 = vsel %vm740, %v894, %v886
        %v896 = vrot.slane %v863, 3
        %v898 = vrot.slane %v864, 4
        %v900 = vrot.slane %v865, 6
        %v903 = vrot.slane %v867, 1
        %v904 = vsel %vm888, %v871, %v873
        %v905 = vsel %vm750, %v904, %v896
        %v906 = vsel %vm748, %v905, %v898
        %v907 = vsel %vm746, %v906, %v881
        %v908 = vsel %vm744, %v907, %v900
        %v909 = vsel %vm742, %v908, %v886
        %v910 = vsel %vm740, %v909, %v866
        %v911 = vrot.slane %v863, 4
        %v913 = vrot.slane %v865, 7
        %v916 = vrot.slane %v867, 2
        %v917 = vsel %vm888, %v873, %v896
        %v918 = vsel %vm750, %v917, %v911
        %v919 = vsel %vm748, %v918, %v881
        %v920 = vsel %vm746, %v919, %v900
        %v921 = vsel %vm744, %v920, %v913
        %v922 = vsel %vm742, %v921, %v866
        %v923 = vsel %vm740, %v922, %v903
        %v924 = vrot.slane %v863, 7
        %v926 = vrot.slane %v864, 1
        %v928 = vrot.slane %v865, 2
        %v930 = vrot.slane %v865, 3
        %v932 = vrot.slane %v866, 4
        %v934 = vrot.slane %v867, 5
        %v936 = vrot.slane %v867, 6
        %v938 = vrot.slane %v867, 7
        %v939 = vsel %vm888, %v924, %v864
        %v940 = vsel %vm750, %v939, %v926
        %v941 = vsel %vm748, %v940, %v928
        %v942 = vsel %vm746, %v941, %v930
        %v943 = vsel %vm744, %v942, %v932
        %v944 = vsel %vm742, %v943, %v934
        %v945 = vsel %vm740, %v944, %v936
        %v946 = vrot.slane %v864, 2
        %v948 = vrot.slane %v866, 5
        %v951 = vsel %vm888, %v864, %v926
        %v952 = vsel %vm750, %v951, %v946
        %v953 = vsel %vm748, %v952, %v930
        %v954 = vsel %vm746, %v953, %v932
        %v955 = vsel %vm744, %v954, %v948
        %v956 = vsel %vm742, %v955, %v936
        %v957 = vsel %vm740, %v956, %v938
        %v959 = vrot.slane %v868, 1
        %v960 = vsel %vm888, %v926, %v946
        %v961 = vsel %vm750, %v960, %v876
        %v962 = vsel %vm748, %v961, %v879
        %v963 = vsel %vm746, %v962, %v948
        %v964 = vsel %vm744, %v963, %v884
        %v965 = vsel %vm742, %v964, %v938
        %v966 = vsel %vm740, %v965, %v867
        %v967 = vrot.slane %v864, 6
        %v969 = vrot.slane %v866, 1
        %v971 = vrot.slane %v866, 2
        %v973 = vrot.slane %v867, 3
        %v975 = vrot.slane %v868, 4
        %v977 = vrot.slane %v868, 5
        %v979 = vrot.slane %v868, 6
        %v980 = vsel %vm888, %v967, %v913
        %v981 = vsel %vm750, %v980, %v865
        %v982 = vsel %vm748, %v981, %v969
        %v983 = vsel %vm746, %v982, %v971
        %v984 = vsel %vm744, %v983, %v973
        %v985 = vsel %vm742, %v984, %v975
        %v986 = vsel %vm740, %v985, %v977
        %v987 = vrot.slane %v864, 7
        %v989 = vrot.slane %v865, 1
        %v991 = vrot.slane %v866, 3
        %v993 = vrot.slane %v867, 4
        %v996 = vrot.slane %v868, 7
        %v997 = vsel %vm888, %v987, %v865
        %v998 = vsel %vm750, %v997, %v989
        %v999 = vsel %vm748, %v998, %v971
        %v1000 = vsel %vm746, %v999, %v991
        %v1001 = vsel %vm744, %v1000, %v993
        %v1002 = vsel %vm742, %v1001, %v977
        %v1003 = vsel %vm740, %v1002, %v979
        %v1005 = vsel %vm888, %v865, %v989
        %v1006 = vsel %vm750, %v1005, %v928
        %v1007 = vsel %vm748, %v1006, %v991
        %v1008 = vsel %vm746, %v1007, %v993
        %v1009 = vsel %vm744, %v1008, %v934
        %v1010 = vsel %vm742, %v1009, %v979
        %v1011 = vsel %vm740, %v1010, %v996
        %1013 = vrot.lane.b32.xlu0 %v910, 8
        %v1014 = vpop.permute.xlu0 %1013
        %1015 = vrot.lane.b32.xlu0 %v903, 8
        %v1016 = vpop.permute.xlu0 %1015
        %1020 = vrot.lane.b32.xlu0 %v923, 16
        %v1021 = vpop.permute.xlu0 %1020
        %1022 = vrot.lane.b32.xlu0 %v916, 16
        %v1023 = vpop.permute.xlu0 %1022
        %1027 = vrot.lane.b32.xlu0 %v945, 24
        %v1028 = vpop.permute.xlu0 %1027
        %1029 = vrot.lane.b32.xlu0 %v938, 24
        %v1030 = vpop.permute.xlu0 %1029
        %1034 = vrot.lane.b32.xlu0 %v957, 32
        %v1035 = vpop.permute.xlu0 %1034
        %1036 = vrot.lane.b32.xlu0 %v868, 32
        %v1037 = vpop.permute.xlu0 %1036
        %1041 = vrot.lane.b32.xlu0 %v966, 40
        %v1042 = vpop.permute.xlu0 %1041
        %1043 = vrot.lane.b32.xlu0 %v959, 40
        %v1044 = vpop.permute.xlu0 %1043
        %1048 = vrot.lane.b32.xlu0 %v986, 48
        %v1049 = vpop.permute.xlu0 %1048
        %1050 = vrot.lane.b32.xlu0 %v979, 48
        %v1051 = vpop.permute.xlu0 %1050
        %1055 = vrot.lane.b32.xlu0 %v1003, 56
        %v1056 = vpop.permute.xlu0 %1055
        %1057 = vrot.lane.b32.xlu0 %v996, 56
        %v1058 = vpop.permute.xlu0 %1057
        %1063 = vrot.lane.b32.xlu0 %v1011, 64
        %v1064 = vpop.permute.xlu0 %1063
        %1065 = vrot.lane.b32.xlu0 %v869, 64
        %v1066 = vpop.permute.xlu0 %1065
        %v1069 = vsel %vm480, %v895, %v1014
        %v1070 = vsel %vm480, %v867, %v1016
        %v1071 = vsel %vm484, %v1069, %v1021
        %v1072 = vsel %vm484, %v1070, %v1023
        %v1073 = vsel %vm488, %v1071, %v1028
        %v1074 = vsel %vm488, %v1072, %v1030
        %v1075 = vsel %vm492, %v1073, %v1035
        %v1076 = vsel %vm492, %v1074, %v1037
        %vm1077 = vcmask 326656
        %v1078 = vsel %vm1077, %v1075, %v1042
        %v1079 = vsel %vm1077, %v1076, %v1044
        %vm1080 = vcmask 392192
        %v1081 = vsel %vm1080, %v1078, %v1049
        %v1082 = vsel %vm1080, %v1079, %v1051
        %vm1083 = vcmask 457728
        %v1084 = vsel %vm1083, %v1081, %v1056
        %v1085 = vsel %vm1083, %v1082, %v1058
        %vm1086 = vcmask 523264
        %v1087 = vsel %vm1086, %v1084, %v1064
        %v1088 = vsel %vm1086, %v1085, %v1066
        %v1089 = vld [vmem:[%s3] sm:$0xf]
        %v1090 = vld [vmem:[%s3 + $0x4] sm:$0xf]
        %v1091 = vld [vmem:[%s3 + $0x8] sm:$0xf]
        %v1092 = vld [vmem:[%s3 + $0xc] sm:$0xf]
        %v1093 = vld [vmem:[%s3 + $0x10] sm:$0xf]
        %v1094 = vld [vmem:[%s3 + $0x14] sm:$0xf]
        %v1095 = vld [vmem:[%s3 + $0x18] sm:$0xf]
        %v1096 = vld [vmem:[%s3 + $0x1c] sm:$0xf]
        %v1097 = vld [vmem:[%s3 + $0x20] sm:$0xf]
        %v1098 = vpack.c.bf16 %v1088, %v1087
        %v1099 = vld [vmem:[%s4] sm:$0x1]
        %v1101 = vlaneseq
        %v1102 = vshrl.u32 %v1101, 7
        %v1103 = vsub.s32 0, %v1102
        %v1104 = vrot.slane %v1099, %v1103
        %v1115 = vunpack.c.l.b16 %v1089
        %v1116 = vunpack.c.l.b16 %v1090
        %v1117 = vunpack.c.l.b16 %v1091
        %v1118 = vunpack.c.l.b16 %v1092
        %v1119 = vunpack.c.l.b16 %v1093
        %v1120 = vunpack.c.l.b16 %v1094
        %v1121 = vunpack.c.l.b16 %v1095
        %v1122 = vunpack.c.l.b16 %v1096
        %v1123 = vunpack.c.l.b16 %v1097
        %v1124 = vpack.c.b16 %v1116, %v1115
        %v1125 = vpack.c.b16 %v1118, %v1117
        %v1126 = vpack.c.b16 %v1120, %v1119
        %v1127 = vpack.c.b16 %v1122, %v1121
        %v1128 = vpack.c.b16 %v1123, %v1123
        %vm1133 = vcmask 588800
        %v1135 = vsel %vm1133, %v1098, 0
        %v1138 = vsel %vm746, %v1128, 0
        %1140 = vmatprep.subr.bf16.mxu0 0
        %1141 = vmatpush1.bf16.msra.mxu0 0
        %1142 = vmatprep.subr.bf16.mxu0 0
        %1143 = vmatpush1.bf16.msra.mxu0 0
        %1144 = vmatprep.subr.bf16.mxu0 0
        %1145 = vmatpush1.bf16.msra.mxu0 0
        %1146 = vmatprep.subr.bf16.mxu0 0
        %1147 = vmatpush1.bf16.msra.mxu0 %v1138
        %1148 = vmatprep.subr.bf16.mxu0 0
        %1149 = vmatpush1.bf16.msra.mxu0 %v1127
        %1150 = vmatprep.subr.bf16.mxu0 0
        %1151 = vmatpush1.bf16.msra.mxu0 %v1126
        %1152 = vmatprep.subr.bf16.mxu0 0
        %1153 = vmatpush1.bf16.msra.mxu0 %v1125
        %1154 = vmatprep.subr.bf16.mxu0 0
        %1155 = vmatpush1.bf16.msra.mxu0 %v1124
        %1156 = vmatprep.subr.bf16.mxu0 0
        %1157 = vmatpush2.bf16.msra.mxu0 0
        %1158 = vmatprep.subr.bf16.mxu0 0
        %1159 = vmatpush2.bf16.msra.mxu0 0
        %1160 = vmatprep.subr.bf16.mxu0 0
        %1161 = vmatpush2.bf16.msra.mxu0 0
        %1162 = vmatprep.subr.bf16.mxu0 0
        %1163 = vmatpush2.bf16.msra.mxu0 0
        %1164 = vmatprep.subr.bf16.mxu0 0
        %1165 = vmatpush2.bf16.msra.mxu0 0
        %1166 = vmatprep.subr.bf16.mxu0 0
        %1167 = vmatpush2.bf16.msra.mxu0 0
        %1168 = vmatprep.subr.bf16.mxu0 0
        %1169 = vmatpush2.bf16.msra.mxu0 0
        %1170 = vmatprep.subr.bf16.mxu0 0
        %1171 = vmatpush2.bf16.msra.mxu0 0
        %1172 = vmatprep.mubr.bf16.mxu0 0
        %1173 = vmatmul.mubr.bf16.gmra.mxu0 %v1135
        %v1174 = vpop.f32.mrf.mxu0
        %v1175 = vadd.f32 %v1104, %v1174
        %v1176 = vpop.f32.mrf.mxu0
        %v1177 = vpop.f32.mrf.mxu0
        %v1178 = vadd.f32 %v1104, %v1177
        %v1179 = vpop.f32.mrf.mxu0
        %1180 = vdwg.mxu0
        %v1181 = vmax.f32 %v1175, 0.0
        %v1182 = vmax.f32 %v1178, 0.0
        %v1184 = vrot.slane %v1181, 1
        %1185 = vrot.lane.b32.xlu0 %v1184, 16
        %v1186 = vpop.permute.xlu0 %1185
        %v1188 = vrot.slane %v1181, 2
        %1189 = vrot.lane.b32.xlu0 %v1188, 32
        %v1190 = vpop.permute.xlu0 %1189
        %v1192 = vrot.slane %v1181, 3
        %1193 = vrot.lane.b32.xlu0 %v1192, 48
        %v1194 = vpop.permute.xlu0 %1193
        %v1196 = vrot.slane %v1181, 4
        %1197 = vrot.lane.b32.xlu0 %v1196, 64
        %v1198 = vpop.permute.xlu0 %1197
        %v1200 = vrot.slane %v1181, 5
        %1201 = vrot.lane.b32.xlu0 %v1200, 80
        %v1202 = vpop.permute.xlu0 %1201
        %v1204 = vrot.slane %v1181, 6
        %1205 = vrot.lane.b32.xlu0 %v1204, 96
        %v1206 = vpop.permute.xlu0 %1205
        %v1208 = vrot.slane %v1181, 7
        %1209 = vrot.lane.b32.xlu0 %v1208, 112
        %v1210 = vpop.permute.xlu0 %1209
        %v1212 = vsel %vm484, %v1181, %v1186
        %v1213 = vsel %vm492, %v1212, %v1190
        %v1214 = vsel %vm1080, %v1213, %v1194
        %v1215 = vsel %vm1086, %v1214, %v1198
        %vm1216 = vcmask 654336
        %v1217 = vsel %vm1216, %v1215, %v1202
        %vm1218 = vcmask 785408
        %v1219 = vsel %vm1218, %v1217, %v1206
        %vm1220 = vcmask 916480
        %v1221 = vsel %vm1220, %v1219, %v1210
        %v1222 = vld [vmem:[%s5] sm:$0xf]
        %v1223 = vld [vmem:[%s5 + $0x4] sm:$0xf]
        %v1224 = vld [vmem:[%s5 + $0x8] sm:$0xf]
        %v1225 = vld [vmem:[%s5 + $0xc] sm:$0xf]
        %v1226 = vld [vmem:[%s5 + $0x10] sm:$0xf]
        %v1227 = vld [vmem:[%s5 + $0x14] sm:$0xf]
        %v1228 = vld [vmem:[%s5 + $0x18] sm:$0xf]
        %v1229 = vld [vmem:[%s5 + $0x1c] sm:$0xf]
        %v1230 = vld [vmem:[%s5 + $0x20] sm:$0xf]
        %v1231 = vld [vmem:[%s5 + $0x24] sm:$0xf]
        %v1232 = vld [vmem:[%s5 + $0x28] sm:$0xf]
        %v1233 = vld [vmem:[%s5 + $0x2c] sm:$0xf]
        %v1234 = vld [vmem:[%s5 + $0x30] sm:$0xf]
        %v1235 = vld [vmem:[%s5 + $0x34] sm:$0xf]
        %v1236 = vld [vmem:[%s5 + $0x38] sm:$0xf]
        %v1237 = vld [vmem:[%s5 + $0x3c] sm:$0xf]
        %v1238 = vld [vmem:[%s5 + $0x40] sm:$0xf]
        %v1239 = vld [vmem:[%s5 + $0x44] sm:$0xf]
        %v1240 = vpack.c.bf16 %v1221, %v1221
        %v1241 = vpack.c.bf16 %v1182, %v1182
        %v1242 = vld [vmem:[%s6] sm:$0x1]
        %v1261 = vunpack.c.l.b16 %v1222
        %v1262 = vunpack.c.l.b16 %v1223
        %v1263 = vunpack.c.l.b16 %v1224
        %v1264 = vunpack.c.l.b16 %v1225
        %v1265 = vunpack.c.l.b16 %v1226
        %v1266 = vunpack.c.l.b16 %v1227
        %v1267 = vunpack.c.l.b16 %v1228
        %v1268 = vunpack.c.l.b16 %v1229
        %v1269 = vunpack.c.l.b16 %v1230
        %v1270 = vunpack.c.l.b16 %v1231
        %v1271 = vunpack.c.l.b16 %v1232
        %v1272 = vunpack.c.l.b16 %v1233
        %v1273 = vunpack.c.l.b16 %v1234
        %v1274 = vunpack.c.l.b16 %v1235
        %v1275 = vunpack.c.l.b16 %v1236
        %v1276 = vunpack.c.l.b16 %v1237
        %v1277 = vunpack.c.l.b16 %v1238
        %v1278 = vunpack.c.l.b16 %v1239
        %v1279 = vpack.c.b16 %v1262, %v1261
        %v1280 = vpack.c.b16 %v1264, %v1263
        %v1281 = vpack.c.b16 %v1266, %v1265
        %v1282 = vpack.c.b16 %v1268, %v1267
        %v1283 = vpack.c.b16 %v1270, %v1269
        %v1284 = vpack.c.b16 %v1272, %v1271
        %v1285 = vpack.c.b16 %v1274, %v1273
        %v1286 = vpack.c.b16 %v1276, %v1275
        %v1287 = vpack.c.b16 %v1278, %v1277
        %v1298 = vsel %vm484, %v1241, 0
        %1300 = vmatprep.subr.bf16.mxu0 0
        %1301 = vmatpush1.bf16.msra.mxu0 %v1286
        %1302 = vmatprep.subr.bf16.mxu0 0
        %1303 = vmatpush1.bf16.msra.mxu0 %v1285
        %1304 = vmatprep.subr.bf16.mxu0 0
        %1305 = vmatpush1.bf16.msra.mxu0 %v1284
        %1306 = vmatprep.subr.bf16.mxu0 0
        %1307 = vmatpush1.bf16.msra.mxu0 %v1283
        %1308 = vmatprep.subr.bf16.mxu0 0
        %1309 = vmatpush1.bf16.msra.mxu0 %v1282
        %1310 = vmatprep.subr.bf16.mxu0 0
        %1311 = vmatpush1.bf16.msra.mxu0 %v1281
        %1312 = vmatprep.subr.bf16.mxu0 0
        %1313 = vmatpush1.bf16.msra.mxu0 %v1280
        %1314 = vmatprep.subr.bf16.mxu0 0
        %1315 = vmatpush1.bf16.msra.mxu0 %v1279
        %1316 = vmatprep.subr.bf16.mxu0 0
        %1317 = vmatpush2.bf16.msra.mxu0 0
        %1318 = vmatprep.subr.bf16.mxu0 0
        %1319 = vmatpush2.bf16.msra.mxu0 0
        %1320 = vmatprep.subr.bf16.mxu0 0
        %1321 = vmatpush2.bf16.msra.mxu0 0
        %1322 = vmatprep.subr.bf16.mxu0 0
        %1323 = vmatpush2.bf16.msra.mxu0 0
        %1324 = vmatprep.subr.bf16.mxu0 0
        %1325 = vmatpush2.bf16.msra.mxu0 0
        %1326 = vmatprep.subr.bf16.mxu0 0
        %1327 = vmatpush2.bf16.msra.mxu0 0
        %1328 = vmatprep.subr.bf16.mxu0 0
        %1329 = vmatpush2.bf16.msra.mxu0 0
        %1330 = vmatprep.subr.bf16.mxu0 0
        %1331 = vmatpush2.bf16.msra.mxu0 %v1287
        %1332 = vmatprep.mubr.bf16.mxu0 %v1298
        %1333 = vmatmul.mubr.bf16.gmra.mxu0 %v1240
        %v1334 = vpop.f32.mrf.mxu0
        %v1335 = vadd.f32 %v1242, %v1334
        %v1336 = vpop.f32.mrf.mxu0
        %v1337 = vpop.f32.mrf.mxu0
        %v1338 = vpop.f32.mrf.mxu0
        %1339 = vdwg.mxu0
        %v1340 = vmax.f32 %v1335, 0.0
        %v1341 = vld [vmem:[%s7] sm:$0xf]
        %v1342 = vld [vmem:[%s7 + $0x4] sm:$0xf]
        %v1343 = vpack.c.bf16 %v1340, %v1340
        %v1344 = vld [vmem:[%s8] sm:$0x1]
        %v1347 = vunpack.c.l.b16 %v1341
        %v1348 = vunpack.c.l.b16 %v1342
        %v1349 = vpack.c.b16 %v1348, %v1347
        %v1352 = vsel %vm484, %v1343, 0
        %1354 = vmatprep.subr.bf16.mxu0 0
        %1355 = vmatpush1.bf16.msra.mxu0 0
        %1356 = vmatprep.subr.bf16.mxu0 0
        %1357 = vmatpush1.bf16.msra.mxu0 0
        %1358 = vmatprep.subr.bf16.mxu0 0
        %1359 = vmatpush1.bf16.msra.mxu0 0
        %1360 = vmatprep.subr.bf16.mxu0 0
        %1361 = vmatpush1.bf16.msra.mxu0 0
        %1362 = vmatprep.subr.bf16.mxu0 0
        %1363 = vmatpush1.bf16.msra.mxu0 0
        %1364 = vmatprep.subr.bf16.mxu0 0
        %1365 = vmatpush1.bf16.msra.mxu0 0
        %1366 = vmatprep.subr.bf16.mxu0 0
        %1367 = vmatpush1.bf16.msra.mxu0 0
        %1368 = vmatprep.subr.bf16.mxu0 0
        %1369 = vmatpush1.bf16.msra.mxu0 %v1349
        %1370 = vmatprep.subr.bf16.mxu0 0
        %1371 = vmatpush2.bf16.msra.mxu0 0
        %1372 = vmatprep.subr.bf16.mxu0 0
        %1373 = vmatpush2.bf16.msra.mxu0 0
        %1374 = vmatprep.subr.bf16.mxu0 0
        %1375 = vmatpush2.bf16.msra.mxu0 0
        %1376 = vmatprep.subr.bf16.mxu0 0
        %1377 = vmatpush2.bf16.msra.mxu0 0
        %1378 = vmatprep.subr.bf16.mxu0 0
        %1379 = vmatpush2.bf16.msra.mxu0 0
        %1380 = vmatprep.subr.bf16.mxu0 0
        %1381 = vmatpush2.bf16.msra.mxu0 0
        %1382 = vmatprep.subr.bf16.mxu0 0
        %1383 = vmatpush2.bf16.msra.mxu0 0
        %1384 = vmatprep.subr.bf16.mxu0 0
        %1385 = vmatpush2.bf16.msra.mxu0 0
        %1386 = vmatprep.mubr.bf16.mxu0 0
        %1387 = vmatmul.mubr.bf16.gmra.mxu0 %v1352
        %v1388 = vpop.f32.mrf.mxu0
        %v1389 = vadd.f32 %v1344, %v1388
        %v1390 = vpop.f32.mrf.mxu0
        %v1391 = vpop.f32.mrf.mxu0
        %v1392 = vpop.f32.mrf.mxu0
        %1393 = vdwg.mxu0
        %v1394 = vmax.f32 %v1389, 0.0
        %v1395 = vld [vmem:[%s9] sm:$0xf]
        %v1396 = vld [vmem:[%s9 + $0x4] sm:$0xf]
        %v1397 = vld [vmem:[%s9 + $0x8] sm:$0xf]
        %v1398 = vld [vmem:[%s9 + $0xc] sm:$0xf]
        %v1399 = vld [vmem:[%s9 + $0x10] sm:$0xf]
        %v1400 = vld [vmem:[%s9 + $0x14] sm:$0xf]
        %v1401 = vld [vmem:[%s9 + $0x18] sm:$0xf]
        %v1402 = vld [vmem:[%s9 + $0x1c] sm:$0xf]
        %v1403 = vpack.c.bf16 %v1394, %v1394
        %v1404 = vld [vmem:[%s10] sm:$0x1]
        %v1413 = vunpack.c.l.b16 %v1395
        %v1414 = vunpack.c.l.b16 %v1396
        %v1415 = vunpack.c.l.b16 %v1397
        %v1416 = vunpack.c.l.b16 %v1398
        %v1417 = vunpack.c.l.b16 %v1399
        %v1418 = vunpack.c.l.b16 %v1400
        %v1419 = vunpack.c.l.b16 %v1401
        %v1420 = vunpack.c.l.b16 %v1402
        %v1421 = vpack.c.b16 %v1414, %v1413
        %v1422 = vpack.c.b16 %v1416, %v1415
        %v1423 = vpack.c.b16 %v1418, %v1417
        %v1424 = vpack.c.b16 %v1420, %v1419
        %v1430 = vsel %vm1086, %v1403, 0
        %1432 = vmatprep.subr.bf16.mxu0 0
        %1433 = vmatpush1.bf16.msra.mxu0 0
        %1434 = vmatprep.subr.bf16.mxu0 0
        %1435 = vmatpush1.bf16.msra.mxu0 0
        %1436 = vmatprep.subr.bf16.mxu0 0
        %1437 = vmatpush1.bf16.msra.mxu0 0
        %1438 = vmatprep.subr.bf16.mxu0 0
        %1439 = vmatpush1.bf16.msra.mxu0 0
        %1440 = vmatprep.subr.bf16.mxu0 0
        %1441 = vmatpush1.bf16.msra.mxu0 %v1424
        %1442 = vmatprep.subr.bf16.mxu0 0
        %1443 = vmatpush1.bf16.msra.mxu0 %v1423
        %1444 = vmatprep.subr.bf16.mxu0 0
        %1445 = vmatpush1.bf16.msra.mxu0 %v1422
        %1446 = vmatprep.subr.bf16.mxu0 0
        %1447 = vmatpush1.bf16.msra.mxu0 %v1421
        %1448 = vmatprep.subr.bf16.mxu0 0
        %1449 = vmatpush2.bf16.msra.mxu0 0
        %1450 = vmatprep.subr.bf16.mxu0 0
        %1451 = vmatpush2.bf16.msra.mxu0 0
        %1452 = vmatprep.subr.bf16.mxu0 0
        %1453 = vmatpush2.bf16.msra.mxu0 0
        %1454 = vmatprep.subr.bf16.mxu0 0
        %1455 = vmatpush2.bf16.msra.mxu0 0
        %1456 = vmatprep.subr.bf16.mxu0 0
        %1457 = vmatpush2.bf16.msra.mxu0 0
        %1458 = vmatprep.subr.bf16.mxu0 0
        %1459 = vmatpush2.bf16.msra.mxu0 0
        %1460 = vmatprep.subr.bf16.mxu0 0
        %1461 = vmatpush2.bf16.msra.mxu0 0
        %1462 = vmatprep.subr.bf16.mxu0 0
        %1463 = vmatpush2.bf16.msra.mxu0 0
        %1464 = vmatprep.mubr.bf16.mxu0 0
        %1465 = vmatmul.mubr.bf16.gmra.mxu0 %v1430
        %v1466 = vpop.f32.mrf.mxu0
        %v1467 = vadd.f32 %v1404, %v1466
        %v1468 = vpop.f32.mrf.mxu0
        %v1469 = vpop.f32.mrf.mxu0
        %v1470 = vpop.f32.mrf.mxu0
        %1471 = vdwg.mxu0
        %1472 = vst [vmem:[%s378] sm:$0x1] %v1467
        %s1473 = sand.u32 %s269, 1
        %s1474 = scalar_lea.sflag [#allocation3], %s1473
        %s1475 = sand.u32 %s269, 1
        %s1476 = scalar_lea.vmem [#allocation2], %s1475
        // Predicated region
        $region65: #{dddqn_forward.1} parent=63 // pred_check
          %p1477 = pneg %p279
        $region66: #{dddqn_forward.1} parent=63 // pred_check_branch
          %1479 = sbr.rel (%p1477) target = $region68
        $region67: #{dddqn_forward.1} parent=63 // pred_region
          %s1481 = ssub.s32 16, 16
          %1482 = vsyncadd %s1474, %s1481
          %s1483 = smul.addr %s25, 16
          %s1484 = scalar_lea.hbm %s11, %s1483
          %s1486 = sshll.u32 %s1476, 4
          %s1487 = int_to_ptr.vmem [resolvable:$true] %s1486
          %1489 = dma.vmem_to_hbm [thread:$0]  %s1487, 16, %s1484, %s1474
        $region68: #{dddqn_forward.1} parent=63 // pred_fallthru
          _
      $region64: #{dddqn_forward.1} parent=5 // pred_fallthru
        _
      %p1490 = scmp.le.s32.totalorder 2, %s20
      // Predicated region
      $region69: #{dddqn_forward.1} parent=5 // pred_check
        %p1491 = pneg %p1490
      $region70: #{dddqn_forward.1} parent=5 // pred_check_branch
        %1493 = sbr.rel (%p1491) target = $region72
      $region71: #{dddqn_forward.1} parent=5 // pred_region
        %s1494 = ssub.s32 %s20, 2
        // Predicated region
        $region73: #{dddqn_forward.1} parent=71 // pred_check
          %p1495 = pneg %p285
        $region74: #{dddqn_forward.1} parent=71 // pred_check_branch
          %1497 = sbr.rel (%p1495) target = $region76
        $region75: #{dddqn_forward.1} parent=71 // pred_region
          %s1498 = sand.u32 %s270, 1
          %s1499 = scalar_lea.sflag [#allocation3], %s1498
          %s1500 = sand.u32 %s270, 1
          %s1501 = scalar_lea.vmem [#allocation2], %s1500
          %1502 = dma.done %s1499, 16
        $region76: #{dddqn_forward.1} parent=71 // pred_fallthru
          _
      $region72: #{dddqn_forward.1} parent=5 // pred_fallthru
        _
    $region6: #{dddqn_forward.1} parent=1 // loop_footer
      %s24 = sadd.s32 1, %s20
    $region7: #{dddqn_forward.1} parent=1 // loop_footer_branch
      %19 = sbr.rel target = $region3
    $region8: #{dddqn_forward.1} parent=1 // loop_exit
      _
    %1503 = vsyncpa [#allocation3], 1
    %s1504 = scalar_lea.sflag [#allocation3], 1
    %1505 = vsyncpa %s1504, 1

</llo_original>
